<compile_context>
chip_gen: v6e
topology: v6e:2x2x1
jax: 0.10.0
libtpu: 0.0.40
codegen_flags: <defaults>
</compile_context>

<pallas_src>
import functools

import jax
import jax.numpy as jnp
from jax import lax
from jax.experimental import pallas as pl
from jax.experimental.pallas import tpu as pltpu


def _resblock_kernel(x_rows_ref, w1b_ref, b1_ref, w2b_ref, b2_ref, out_ref,
                     mid_ref, *, n_batch, h, w, c):
    # x_rows_ref : (N*(H+2), (W+2)*C)  zero-padded input, one padded row per sublane row
    # w1b_ref    : (3, (W+2)*C, W*C)   banded conv1 weights (one slab per kh tap)
    # b1_ref     : (1, W*C)            conv1 bias replicated over w
    # w2b_ref    : (3, (W+2)*C, W*C)   banded conv2 weights
    # b2_ref     : (1, W*C)            conv2 bias replicated over w
    # out_ref    : (N*H, W*C)          lane-dense output rows
    # mid_ref    : (N*(H+2), (W+2)*C)  VMEM scratch: zero-bordered ReLU(conv1)
    hp = h + 2
    wc = w * c
    wpc = (w + 2) * c

    def conv3x3(src, wband_ref, bias_ref):
        # src: (N*(H+2), (W+2)*C) padded rows (loaded value).
        # Returns a list of per-image (H, W*C) float32 results (= conv + bias).
        # Each kh tap is a pure sublane-range slice feeding one MXU matmul with
        # contraction dim (W+2)*C; bias is folded into the accumulator init.
        bias = jnp.broadcast_to(b_val := bias_ref[...].astype(jnp.float32), (h, wc))
        accs = [bias for _ in range(n_batch)]
        for kh in range(3):
            wk = wband_ref[kh]                                   # ((W+2)*C, W*C)
            for n in range(n_batch):
                rows = src[n * hp + kh:n * hp + kh + h, :]       # (H, (W+2)*C)
                accs[n] = accs[n] + jnp.dot(
                    rows, wk, preferred_element_type=jnp.float32)
        return accs

    x_rows = x_rows_ref[...]                                     # (N*(H+2), (W+2)*C)

    # ---- conv1 + ReLU, re-padded into the scratch for conv2 ----
    # grid == (1,), so this zero-fill runs exactly once per call; only the
    # 1-pixel border actually needs it (the interior is fully overwritten).
    mid_ref[...] = jnp.zeros_like(mid_ref)
    y1 = conv3x3(x_rows, w1b_ref, b1_ref)
    for n in range(n_batch):
        mid_ref[n * hp + 1:n * hp + 1 + h, c:c + wc] = jnp.maximum(y1[n], 0.0)

    # ---- conv2 + bias + residual add (identity = interior of padded input) ----
    mid_rows = mid_ref[...]
    y2 = conv3x3(mid_rows, w2b_ref, b2_ref)
    for n in range(n_batch):
        identity = x_rows[n * hp + 1:n * hp + 1 + h, c:c + wc]
        out_ref[n * h:(n + 1) * h, :] = (y2[n] + identity).astype(out_ref.dtype)


def _band_weight(w_oihw, width):
    """PyTorch (Cout, Cin, 3, 3) conv weight -> banded (3, (W+2)*Cin, W*Cout).

    B[kh, wp*Cin + ci, w*Cout + co] = w[co, ci, kh, wp - w] for 0 <= wp - w <= 2,
    zero otherwise, so a padded image row (flattened as wp*Cin + ci) times B[kh]
    yields the kh-tap contribution of the 3x3 "same" conv for every (w, co).
    """
    c_out, c_in, kh_n, kw_n = w_oihw.shape
    wp_n = width + 2
    wt = jnp.transpose(w_oihw, (2, 3, 1, 0)).astype(jnp.float32)   # (kh, kw, ci, co)
    sel = (jnp.arange(wp_n)[None, :, None]
           == jnp.arange(width)[None, None, :] + jnp.arange(kw_n)[:, None, None]
           ).astype(jnp.float32)                                   # (kw, wp, w)
    band = jnp.einsum('kpw,hkio->hpiwo', sel, wt)                  # (kh, wp, ci, w, co)
    return band.reshape(kh_n, wp_n * c_in, width * c_out)


@jax.jit
def residual_block_db(x_nchw, w1, b1, w2, b2):
    """Pallas implementation of _Residual_Block_DB.forward.

    x_nchw : (N, C, H, W) float32
    w1, w2 : (C, C, 3, 3) float32 (PyTorch Conv2d layout: out, in, kh, kw)
    b1, b2 : (C,) float32
    returns (N, C, H, W) float32
    """
    n, c, h, w = x_nchw.shape
    hp = h + 2
    wc = w * c
    wpc = (w + 2) * c

    # NCHW -> NHWC -> zero-pad H/W -> flatten each padded row to (W+2)*C lanes.
    # transpose + pad + (bitcast) reshape fuse into a single XLA pass.
    x_nhwc = jnp.transpose(x_nchw, (0, 2, 3, 1)).astype(jnp.float32)
    x_rows = jnp.pad(x_nhwc, ((0, 0), (1, 1), (1, 1), (0, 0))).reshape(n * hp, wpc)

    # Pre-packed banded weights and w-replicated biases (lane-dense slabs).
    w1b = _band_weight(w1, w)                                   # (3, (W+2)*C, W*C)
    w2b = _band_weight(w2, w)
    b1r = jnp.tile(b1.astype(jnp.float32), w).reshape(1, wc)    # (1, W*C)
    b2r = jnp.tile(b2.astype(jnp.float32), w).reshape(1, wc)

    kernel = functools.partial(_resblock_kernel, n_batch=n, h=h, w=w, c=c)
    out_rows = pl.pallas_call(
        kernel,
        out_shape=jax.ShapeDtypeStruct((n * h, wc), jnp.float32),
        grid_spec=pltpu.PrefetchScalarGridSpec(
            num_scalar_prefetch=0,
            grid=(1,),                       # whole (tiny) problem in one step
            in_specs=[
                pl.BlockSpec((n * hp, wpc), lambda i: (0, 0)),
                pl.BlockSpec((3, wpc, wc), lambda i: (0, 0, 0)),
                pl.BlockSpec((1, wc), lambda i: (0, 0)),
                pl.BlockSpec((3, wpc, wc), lambda i: (0, 0, 0)),
                pl.BlockSpec((1, wc), lambda i: (0, 0)),
            ],
            out_specs=pl.BlockSpec((n * h, wc), lambda i: (0, 0)),
            scratch_shapes=[pltpu.VMEM((n * hp, wpc), jnp.float32)],
        ),
        compiler_params=pltpu.CompilerParams(
            dimension_semantics=("arbitrary",),
        ),
    )(x_rows, w1b, b1r, w2b, b2r)

    # (N*H, W*C) -> (N, H, W, C) -> NCHW  (pure layout plumbing in the wrapper).
    return jnp.transpose(out_rows.reshape(n, h, w, c), (0, 3, 1, 2))


def _reference(x_nchw, w1, b1, w2, b2):
    """Pure-JAX reference (lax.conv), NCHW, matches PyTorch semantics."""
    dn = lax.conv_dimension_numbers(x_nchw.shape, w1.shape, ("NCHW", "OIHW", "NCHW"))
    y = lax.conv_general_dilated(x_nchw, w1, (1, 1), [(1, 1), (1, 1)],
                                 dimension_numbers=dn)
    y = jnp.maximum(y + b1.reshape(1, -1, 1, 1), 0.0)
    y = lax.conv_general_dilated(y, w2, (1, 1), [(1, 1), (1, 1)],
                                 dimension_numbers=dn)
    y = y + b2.reshape(1, -1, 1, 1)
    return y + x_nchw


if __name__ == "__main__":
    N, C, H, W = 2, 4, 16, 16  # num_ft = 4

    key = jax.random.PRNGKey(0)
    kx, k1, k2, k3, k4 = jax.random.split(key, 5)

    x = jax.random.normal(kx, (N, C, H, W), dtype=jnp.float32)
    # Deterministic synthetic parameters (PyTorch Conv2d shapes: (out, in, 3, 3)).
    w1 = jax.random.normal(k1, (C, C, 3, 3), dtype=jnp.float32) * 0.1
    b1 = jax.random.normal(k2, (C,), dtype=jnp.float32) * 0.1
    w2 = jax.random.normal(k3, (C, C, 3, 3), dtype=jnp.float32) * 0.1
    b2 = jax.random.normal(k4, (C,), dtype=jnp.float32) * 0.1

    out = jax.block_until_ready(residual_block_db(x, w1, b1, w2, b2))
    ref = jax.block_until_ready(_reference(x, w1, b1, w2, b2))

    assert out.shape == (N, C, H, W)
    assert jnp.allclose(out, ref, atol=1e-4, rtol=1e-4), "mismatch vs reference"

    print("KERNEL_OK")
</pallas_src>

<mosaic_0001>
module attributes {stable_mosaic.version = 11 : i64} {
  func.func @_resblock_kernel(%arg0: i32, %arg1: memref<36x72xf32, #tpu.memory_space<vmem>>, %arg2: memref<3x72x64xf32, #tpu.memory_space<vmem>>, %arg3: memref<1x64xf32, #tpu.memory_space<vmem>>, %arg4: memref<3x72x64xf32, #tpu.memory_space<vmem>>, %arg5: memref<1x64xf32, #tpu.memory_space<vmem>>, %arg6: memref<32x64xf32, #tpu.memory_space<vmem>>, %arg7: memref<36x72xf32, #tpu.memory_space<vmem>>) attributes {dimension_semantics = [#tpu.dimension_semantics<arbitrary>], iteration_bounds = array<i64: 1>, scalar_prefetch = 0 : i64, scratch_operands = 1 : i64, tpu.core_type = #tpu.core_type<tc>, window_params = [{pipeline_mode = #tpu.pipeline_mode<synchronous>, transform_indices = @transform_0, window_bounds = array<i64: 36, 72>}, {pipeline_mode = #tpu.pipeline_mode<synchronous>, transform_indices = @transform_1, window_bounds = array<i64: 3, 72, 64>}, {pipeline_mode = #tpu.pipeline_mode<synchronous>, transform_indices = @transform_2, window_bounds = array<i64: 1, 64>}, {pipeline_mode = #tpu.pipeline_mode<synchronous>, transform_indices = @transform_3, window_bounds = array<i64: 3, 72, 64>}, {pipeline_mode = #tpu.pipeline_mode<synchronous>, transform_indices = @transform_4, window_bounds = array<i64: 1, 64>}, {pipeline_mode = #tpu.pipeline_mode<synchronous>, transform_indices = @transform_5, window_bounds = array<i64: 32, 64>}]} {
    %c0 = arith.constant 0 : index
    %c0_0 = arith.constant 0 : index
    %0 = vector.load %arg1[%c0, %c0_0] : memref<36x72xf32, #tpu.memory_space<vmem>>, vector<36x72xf32>
    %cst = arith.constant 0.000000e+00 : f32
    %1 = vector.broadcast %cst : f32 to vector<36x72xf32>
    %c0_1 = arith.constant 0 : index
    %c0_2 = arith.constant 0 : index
    %2 = vector.load %arg7[%c0_1, %c0_2] : memref<36x72xf32, #tpu.memory_space<vmem>>, vector<36x72xf32>
    tpu.vector_store %arg7[%c0_1, %c0_2], %1 {strides = array<i32>} : memref<36x72xf32, #tpu.memory_space<vmem>>, vector<36x72xf32>,
    %c0_3 = arith.constant 0 : index
    %c0_4 = arith.constant 0 : index
    %3 = vector.load %arg3[%c0_3, %c0_4] : memref<1x64xf32, #tpu.memory_space<vmem>>, vector<1x64xf32>
    %4 = vector.shape_cast %3 : vector<1x64xf32> to vector<1x64xf32>
    %5 = vector.broadcast %4 : vector<1x64xf32> to vector<16x64xf32>
    %c0_5 = arith.constant 0 : index
    %c0_6 = arith.constant 0 : index
    %c0_7 = arith.constant 0 : index
    %6 = vector.load %arg2[%c0_5, %c0_6, %c0_7] : memref<3x72x64xf32, #tpu.memory_space<vmem>>, vector<1x72x64xf32>
    %7 = vector.shape_cast %6 : vector<1x72x64xf32> to vector<72x64xf32>
    %8 = vector.extract_strided_slice %0 {offsets = [0, 0], sizes = [16, 72], strides = [1, 1]} : vector<36x72xf32> to vector<16x72xf32>
    %cst_8 = arith.constant dense<0.000000e+00> : vector<16x64xf32>
    %9 = tpu.matmul %8, %7, %cst_8 {dimension_numbers = #tpu.dot_dimension_numbers<[1], [0], [0], [1], [0, 0, 1, 1], [], []>} : vector<16x72xf32>, vector<72x64xf32>, vector<16x64xf32> -> vector<16x64xf32>
    %10 = arith.addf %5, %9 : vector<16x64xf32>
    %11 = vector.extract_strided_slice %0 {offsets = [18, 0], sizes = [16, 72], strides = [1, 1]} : vector<36x72xf32> to vector<16x72xf32>
    %cst_9 = arith.constant dense<0.000000e+00> : vector<16x64xf32>
    %12 = tpu.matmul %11, %7, %cst_9 {dimension_numbers = #tpu.dot_dimension_numbers<[1], [0], [0], [1], [0, 0, 1, 1], [], []>} : vector<16x72xf32>, vector<72x64xf32>, vector<16x64xf32> -> vector<16x64xf32>
    %13 = arith.addf %5, %12 : vector<16x64xf32>
    %c1 = arith.constant 1 : index
    %c0_10 = arith.constant 0 : index
    %c0_11 = arith.constant 0 : index
    %14 = vector.load %arg2[%c1, %c0_10, %c0_11] : memref<3x72x64xf32, #tpu.memory_space<vmem>>, vector<1x72x64xf32>
    %15 = vector.shape_cast %14 : vector<1x72x64xf32> to vector<72x64xf32>
    %16 = vector.extract_strided_slice %0 {offsets = [1, 0], sizes = [16, 72], strides = [1, 1]} : vector<36x72xf32> to vector<16x72xf32>
    %cst_12 = arith.constant dense<0.000000e+00> : vector<16x64xf32>
    %17 = tpu.matmul %16, %15, %cst_12 {dimension_numbers = #tpu.dot_dimension_numbers<[1], [0], [0], [1], [0, 0, 1, 1], [], []>} : vector<16x72xf32>, vector<72x64xf32>, vector<16x64xf32> -> vector<16x64xf32>
    %18 = arith.addf %10, %17 : vector<16x64xf32>
    %19 = vector.extract_strided_slice %0 {offsets = [19, 0], sizes = [16, 72], strides = [1, 1]} : vector<36x72xf32> to vector<16x72xf32>
    %cst_13 = arith.constant dense<0.000000e+00> : vector<16x64xf32>
    %20 = tpu.matmul %19, %15, %cst_13 {dimension_numbers = #tpu.dot_dimension_numbers<[1], [0], [0], [1], [0, 0, 1, 1], [], []>} : vector<16x72xf32>, vector<72x64xf32>, vector<16x64xf32> -> vector<16x64xf32>
    %21 = arith.addf %13, %20 : vector<16x64xf32>
    %c2 = arith.constant 2 : index
    %c0_14 = arith.constant 0 : index
    %c0_15 = arith.constant 0 : index
    %22 = vector.load %arg2[%c2, %c0_14, %c0_15] : memref<3x72x64xf32, #tpu.memory_space<vmem>>, vector<1x72x64xf32>
    %23 = vector.shape_cast %22 : vector<1x72x64xf32> to vector<72x64xf32>
    %24 = vector.extract_strided_slice %0 {offsets = [2, 0], sizes = [16, 72], strides = [1, 1]} : vector<36x72xf32> to vector<16x72xf32>
    %cst_16 = arith.constant dense<0.000000e+00> : vector<16x64xf32>
    %25 = tpu.matmul %24, %23, %cst_16 {dimension_numbers = #tpu.dot_dimension_numbers<[1], [0], [0], [1], [0, 0, 1, 1], [], []>} : vector<16x72xf32>, vector<72x64xf32>, vector<16x64xf32> -> vector<16x64xf32>
    %26 = arith.addf %18, %25 : vector<16x64xf32>
    %27 = vector.extract_strided_slice %0 {offsets = [20, 0], sizes = [16, 72], strides = [1, 1]} : vector<36x72xf32> to vector<16x72xf32>
    %cst_17 = arith.constant dense<0.000000e+00> : vector<16x64xf32>
    %28 = tpu.matmul %27, %23, %cst_17 {dimension_numbers = #tpu.dot_dimension_numbers<[1], [0], [0], [1], [0, 0, 1, 1], [], []>} : vector<16x72xf32>, vector<72x64xf32>, vector<16x64xf32> -> vector<16x64xf32>
    %29 = arith.addf %21, %28 : vector<16x64xf32>
    %cst_18 = arith.constant 0.000000e+00 : f32
    %30 = vector.broadcast %cst_18 : f32 to vector<16x64xf32>
    %31 = arith.maximumf %26, %30 : vector<16x64xf32>
    %c1_19 = arith.constant 1 : index
    %c4 = arith.constant 4 : index
    %32 = vector.load %arg7[%c1_19, %c4] : memref<36x72xf32, #tpu.memory_space<vmem>>, vector<16x64xf32>
    tpu.vector_store %arg7[%c1_19, %c4], %31 {strides = array<i32>} : memref<36x72xf32, #tpu.memory_space<vmem>>, vector<16x64xf32>,
    %cst_20 = arith.constant 0.000000e+00 : f32
    %33 = vector.broadcast %cst_20 : f32 to vector<16x64xf32>
    %34 = arith.maximumf %29, %33 : vector<16x64xf32>
    %c19 = arith.constant 19 : index
    %c4_21 = arith.constant 4 : index
    %35 = vector.load %arg7[%c19, %c4_21] : memref<36x72xf32, #tpu.memory_space<vmem>>, vector<16x64xf32>
    tpu.vector_store %arg7[%c19, %c4_21], %34 {strides = array<i32>} : memref<36x72xf32, #tpu.memory_space<vmem>>, vector<16x64xf32>,
    %c0_22 = arith.constant 0 : index
    %c0_23 = arith.constant 0 : index
    %36 = vector.load %arg7[%c0_22, %c0_23] : memref<36x72xf32, #tpu.memory_space<vmem>>, vector<36x72xf32>
    %c0_24 = arith.constant 0 : index
    %c0_25 = arith.constant 0 : index
    %37 = vector.load %arg5[%c0_24, %c0_25] : memref<1x64xf32, #tpu.memory_space<vmem>>, vector<1x64xf32>
    %38 = vector.shape_cast %37 : vector<1x64xf32> to vector<1x64xf32>
    %39 = vector.broadcast %38 : vector<1x64xf32> to vector<16x64xf32>
    %c0_26 = arith.constant 0 : index
    %c0_27 = arith.constant 0 : index
    %c0_28 = arith.constant 0 : index
    %40 = vector.load %arg4[%c0_26, %c0_27, %c0_28] : memref<3x72x64xf32, #tpu.memory_space<vmem>>, vector<1x72x64xf32>
    %41 = vector.shape_cast %40 : vector<1x72x64xf32> to vector<72x64xf32>
    %42 = vector.extract_strided_slice %36 {offsets = [0, 0], sizes = [16, 72], strides = [1, 1]} : vector<36x72xf32> to vector<16x72xf32>
    %cst_29 = arith.constant dense<0.000000e+00> : vector<16x64xf32>
    %43 = tpu.matmul %42, %41, %cst_29 {dimension_numbers = #tpu.dot_dimension_numbers<[1], [0], [0], [1], [0, 0, 1, 1], [], []>} : vector<16x72xf32>, vector<72x64xf32>, vector<16x64xf32> -> vector<16x64xf32>
    %44 = arith.addf %39, %43 : vector<16x64xf32>
    %45 = vector.extract_strided_slice %36 {offsets = [18, 0], sizes = [16, 72], strides = [1, 1]} : vector<36x72xf32> to vector<16x72xf32>
    %cst_30 = arith.constant dense<0.000000e+00> : vector<16x64xf32>
    %46 = tpu.matmul %45, %41, %cst_30 {dimension_numbers = #tpu.dot_dimension_numbers<[1], [0], [0], [1], [0, 0, 1, 1], [], []>} : vector<16x72xf32>, vector<72x64xf32>, vector<16x64xf32> -> vector<16x64xf32>
    %47 = arith.addf %39, %46 : vector<16x64xf32>
    %c1_31 = arith.constant 1 : index
    %c0_32 = arith.constant 0 : index
    %c0_33 = arith.constant 0 : index
    %48 = vector.load %arg4[%c1_31, %c0_32, %c0_33] : memref<3x72x64xf32, #tpu.memory_space<vmem>>, vector<1x72x64xf32>
    %49 = vector.shape_cast %48 : vector<1x72x64xf32> to vector<72x64xf32>
    %50 = vector.extract_strided_slice %36 {offsets = [1, 0], sizes = [16, 72], strides = [1, 1]} : vector<36x72xf32> to vector<16x72xf32>
    %cst_34 = arith.constant dense<0.000000e+00> : vector<16x64xf32>
    %51 = tpu.matmul %50, %49, %cst_34 {dimension_numbers = #tpu.dot_dimension_numbers<[1], [0], [0], [1], [0, 0, 1, 1], [], []>} : vector<16x72xf32>, vector<72x64xf32>, vector<16x64xf32> -> vector<16x64xf32>
    %52 = arith.addf %44, %51 : vector<16x64xf32>
    %53 = vector.extract_strided_slice %36 {offsets = [19, 0], sizes = [16, 72], strides = [1, 1]} : vector<36x72xf32> to vector<16x72xf32>
    %cst_35 = arith.constant dense<0.000000e+00> : vector<16x64xf32>
    %54 = tpu.matmul %53, %49, %cst_35 {dimension_numbers = #tpu.dot_dimension_numbers<[1], [0], [0], [1], [0, 0, 1, 1], [], []>} : vector<16x72xf32>, vector<72x64xf32>, vector<16x64xf32> -> vector<16x64xf32>
    %55 = arith.addf %47, %54 : vector<16x64xf32>
    %c2_36 = arith.constant 2 : index
    %c0_37 = arith.constant 0 : index
    %c0_38 = arith.constant 0 : index
    %56 = vector.load %arg4[%c2_36, %c0_37, %c0_38] : memref<3x72x64xf32, #tpu.memory_space<vmem>>, vector<1x72x64xf32>
    %57 = vector.shape_cast %56 : vector<1x72x64xf32> to vector<72x64xf32>
    %58 = vector.extract_strided_slice %36 {offsets = [2, 0], sizes = [16, 72], strides = [1, 1]} : vector<36x72xf32> to vector<16x72xf32>
    %cst_39 = arith.constant dense<0.000000e+00> : vector<16x64xf32>
    %59 = tpu.matmul %58, %57, %cst_39 {dimension_numbers = #tpu.dot_dimension_numbers<[1], [0], [0], [1], [0, 0, 1, 1], [], []>} : vector<16x72xf32>, vector<72x64xf32>, vector<16x64xf32> -> vector<16x64xf32>
    %60 = arith.addf %52, %59 : vector<16x64xf32>
    %61 = vector.extract_strided_slice %36 {offsets = [20, 0], sizes = [16, 72], strides = [1, 1]} : vector<36x72xf32> to vector<16x72xf32>
    %cst_40 = arith.constant dense<0.000000e+00> : vector<16x64xf32>
    %62 = tpu.matmul %61, %57, %cst_40 {dimension_numbers = #tpu.dot_dimension_numbers<[1], [0], [0], [1], [0, 0, 1, 1], [], []>} : vector<16x72xf32>, vector<72x64xf32>, vector<16x64xf32> -> vector<16x64xf32>
    %63 = arith.addf %55, %62 : vector<16x64xf32>
    %64 = vector.extract_strided_slice %0 {offsets = [1, 4], sizes = [16, 64], strides = [1, 1]} : vector<36x72xf32> to vector<16x64xf32>
    %65 = arith.addf %60, %64 : vector<16x64xf32>
    %c0_41 = arith.constant 0 : index
    %c0_42 = arith.constant 0 : index
    %66 = vector.load %arg6[%c0_41, %c0_42] : memref<32x64xf32, #tpu.memory_space<vmem>>, vector<16x64xf32>
    tpu.vector_store %arg6[%c0_41, %c0_42], %65 {strides = array<i32>} : memref<32x64xf32, #tpu.memory_space<vmem>>, vector<16x64xf32>,
    %67 = vector.extract_strided_slice %0 {offsets = [19, 4], sizes = [16, 64], strides = [1, 1]} : vector<36x72xf32> to vector<16x64xf32>
    %68 = arith.addf %63, %67 : vector<16x64xf32>
    %c16 = arith.constant 16 : index
    %c0_43 = arith.constant 0 : index
    %69 = vector.load %arg6[%c16, %c0_43] : memref<32x64xf32, #tpu.memory_space<vmem>>, vector<16x64xf32>
    tpu.vector_store %arg6[%c16, %c0_43], %68 {strides = array<i32>} : memref<32x64xf32, #tpu.memory_space<vmem>>, vector<16x64xf32>,
    return
  }
  func.func @transform_0(%arg0: i32) -> (i32, i32) {
    %c0_i32 = arith.constant 0 : i32
    %c0_i32_0 = arith.constant 0 : i32
    %c0_i32_1 = arith.constant 0 : i32
    return %c0_i32, %c0_i32_0 : i32, i32
  }
  func.func @transform_1(%arg0: i32) -> (i32, i32, i32) {
    %c0_i32 = arith.constant 0 : i32
    %c0_i32_0 = arith.constant 0 : i32
    %c0_i32_1 = arith.constant 0 : i32
    %c0_i32_2 = arith.constant 0 : i32
    return %c0_i32, %c0_i32_0, %c0_i32_1 : i32, i32, i32
  }
  func.func @transform_2(%arg0: i32) -> (i32, i32) {
    %c0_i32 = arith.constant 0 : i32
    %c0_i32_0 = arith.constant 0 : i32
    %c0_i32_1 = arith.constant 0 : i32
    return %c0_i32, %c0_i32_0 : i32, i32
  }
  func.func @transform_3(%arg0: i32) -> (i32, i32, i32) {
    %c0_i32 = arith.constant 0 : i32
    %c0_i32_0 = arith.constant 0 : i32
    %c0_i32_1 = arith.constant 0 : i32
    %c0_i32_2 = arith.constant 0 : i32
    return %c0_i32, %c0_i32_0, %c0_i32_1 : i32, i32, i32
  }
  func.func @transform_4(%arg0: i32) -> (i32, i32) {
    %c0_i32 = arith.constant 0 : i32
    %c0_i32_0 = arith.constant 0 : i32
    %c0_i32_1 = arith.constant 0 : i32
    return %c0_i32, %c0_i32_0 : i32, i32
  }
  func.func @transform_5(%arg0: i32) -> (i32, i32) {
    %c0_i32 = arith.constant 0 : i32
    %c0_i32_0 = arith.constant 0 : i32
    %c0_i32_1 = arith.constant 0 : i32
    return %c0_i32, %c0_i32_0 : i32, i32
  }
}

</mosaic_0001>

<llo_original>
// kernel: tile.13
$region0: #{tile.13}
  #allocation0 [shape = 's32[1]{0}', space=sflag, size = 0x4, scoped, tag = 'scoped memory for tile.13']
  %s0 = inlined_call_operand.vmem [shape: f32[4], index: 0, kind: input, shape index: {}]
  %s1 = inlined_call_operand.vmem [shape: f32[16,4], index: 1, kind: output, shape index: {}]
  // Predicated region
  $region2: #{tile.13} parent=0 // pred_check
    _
  $region3: #{tile.13} parent=0 // pred_check_branch
    %3 = sbr.rel (0) target = $region5
  $region4: #{tile.13} parent=0 // pred_region
    _
  $region5: #{tile.13} parent=0 // pred_fallthru
    _
  %v4 = vld [vmem:[%s0] ss:$0 sm:$0xff]
  %5 = vst [vmem:[%s1] sm:$0xff] %v4
  %s6 = scalar_lea.vmem %s1, 8
  %7 = vst [vmem:[%s6] sm:$0xff] %v4

// kernel: tile.14
$region0: #{tile.14}
  %s0 = inlined_call_operand.vmem [shape: f32[16,4], index: 0, kind: input, shape index: {}]
  %s1 = inlined_call_operand.vmem [shape: f32[1,64], index: 1, kind: output, shape index: {}]
  $region1: #{tile.14} parent=0
    #allocation0 [shape = 'u8[4096]{0}', space=vmem, size = 0x1000, scoped, tag = 'scoped mem for output reshape']
    %v2 = vld [vmem:[%s0] sm:$0x1]
    %vm3 = vcmask 31744
    %4 = vst.msk [vmem:[#allocation0] sm:$0x1] %vm3, %v2
    %s5 = scalar_lea.vmem %s0, 15
    %v6 = vld [vmem:[%s5] sm:$0x1]
    %7 = vrot.lane.b32.xlu0 %v6, 60
    %v8 = vpop.permute.xlu0 %7
    %vm9 = vcmask 523744
    %10 = vst.msk [vmem:[#allocation0] sm:$0x1] %vm9, %v8
    %s11 = scalar_lea.vmem %s0, 14
    %v12 = vld [vmem:[%s11] sm:$0x1]
    %13 = vrot.lane.b32.xlu0 %v12, 56
    %v14 = vpop.permute.xlu0 %13
    %vm15 = vcmask 490944
    %16 = vst.msk [vmem:[#allocation0] sm:$0x1] %vm15, %v14
    %s17 = scalar_lea.vmem %s0, 13
    %v18 = vld [vmem:[%s17] sm:$0x1]
    %19 = vrot.lane.b32.xlu0 %v18, 52
    %v20 = vpop.permute.xlu0 %19
    %vm21 = vcmask 458144
    %22 = vst.msk [vmem:[#allocation0] sm:$0x1] %vm21, %v20
    %s23 = scalar_lea.vmem %s0, 12
    %v24 = vld [vmem:[%s23] sm:$0x1]
    %25 = vrot.lane.b32.xlu0 %v24, 48
    %v26 = vpop.permute.xlu0 %25
    %vm27 = vcmask 425344
    %28 = vst.msk [vmem:[#allocation0] sm:$0x1] %vm27, %v26
    %s29 = scalar_lea.vmem %s0, 11
    %v30 = vld [vmem:[%s29] sm:$0x1]
    %31 = vrot.lane.b32.xlu0 %v30, 44
    %v32 = vpop.permute.xlu0 %31
    %vm33 = vcmask 392544
    %34 = vst.msk [vmem:[#allocation0] sm:$0x1] %vm33, %v32
    %s35 = scalar_lea.vmem %s0, 10
    %v36 = vld [vmem:[%s35] sm:$0x1]
    %37 = vrot.lane.b32.xlu0 %v36, 40
    %v38 = vpop.permute.xlu0 %37
    %vm39 = vcmask 359744
    %40 = vst.msk [vmem:[#allocation0] sm:$0x1] %vm39, %v38
    %s41 = scalar_lea.vmem %s0, 9
    %v42 = vld [vmem:[%s41] sm:$0x1]
    %43 = vrot.lane.b32.xlu0 %v42, 36
    %v44 = vpop.permute.xlu0 %43
    %vm45 = vcmask 326944
    %46 = vst.msk [vmem:[#allocation0] sm:$0x1] %vm45, %v44
    %s47 = scalar_lea.vmem %s0, 8
    %v48 = vld [vmem:[%s47] sm:$0x1]
    %49 = vrot.lane.b32.xlu0 %v48, 32
    %v50 = vpop.permute.xlu0 %49
    %vm51 = vcmask 294144
    %52 = vst.msk [vmem:[#allocation0] sm:$0x1] %vm51, %v50
    %s53 = scalar_lea.vmem %s0, 7
    %v54 = vld [vmem:[%s53] sm:$0x1]
    %55 = vrot.lane.b32.xlu0 %v54, 28
    %v56 = vpop.permute.xlu0 %55
    %vm57 = vcmask 261344
    %58 = vst.msk [vmem:[#allocation0] sm:$0x1] %vm57, %v56
    %s59 = scalar_lea.vmem %s0, 6
    %v60 = vld [vmem:[%s59] sm:$0x1]
    %61 = vrot.lane.b32.xlu0 %v60, 24
    %v62 = vpop.permute.xlu0 %61
    %vm63 = vcmask 228544
    %64 = vst.msk [vmem:[#allocation0] sm:$0x1] %vm63, %v62
    %s65 = scalar_lea.vmem %s0, 5
    %v66 = vld [vmem:[%s65] sm:$0x1]
    %67 = vrot.lane.b32.xlu0 %v66, 20
    %v68 = vpop.permute.xlu0 %67
    %vm69 = vcmask 195744
    %70 = vst.msk [vmem:[#allocation0] sm:$0x1] %vm69, %v68
    %s71 = scalar_lea.vmem %s0, 4
    %v72 = vld [vmem:[%s71] sm:$0x1]
    %73 = vrot.lane.b32.xlu0 %v72, 16
    %v74 = vpop.permute.xlu0 %73
    %vm75 = vcmask 162944
    %76 = vst.msk [vmem:[#allocation0] sm:$0x1] %vm75, %v74
    %s77 = scalar_lea.vmem %s0, 3
    %v78 = vld [vmem:[%s77] sm:$0x1]
    %79 = vrot.lane.b32.xlu0 %v78, 12
    %v80 = vpop.permute.xlu0 %79
    %vm81 = vcmask 130144
    %82 = vst.msk [vmem:[#allocation0] sm:$0x1] %vm81, %v80
    %s83 = scalar_lea.vmem %s0, 2
    %v84 = vld [vmem:[%s83] sm:$0x1]
    %85 = vrot.lane.b32.xlu0 %v84, 8
    %v86 = vpop.permute.xlu0 %85
    %vm87 = vcmask 97344
    %88 = vst.msk [vmem:[#allocation0] sm:$0x1] %vm87, %v86
    %s89 = scalar_lea.vmem %s0, 1
    %v90 = vld [vmem:[%s89] sm:$0x1]
    %91 = vrot.lane.b32.xlu0 %v90, 4
    %v92 = vpop.permute.xlu0 %91
    %vm93 = vcmask 64544
    %94 = vst.msk [vmem:[#allocation0] sm:$0x1] %vm93, %v92
    %s96 = sshll.u32 1, 1
    %s97 = ssub.s32 %s96, 1
    %v99 = vld [vmem:[#allocation0] sm:%s97]
    %s100 = sshll.u32 1, 1
    %s101 = ssub.s32 %s100, 1
    %102 = vst [vmem:[%s1] sm:%s101] %v99

// kernel: residual_block_db.1
$region0: #{residual_block_db.1}
  #allocation0 [shape = 'u32[]', space=smem, size = 0x4, offset = 0x4, fixed_abs, tag = 'smem constant byte address 0x4 - core index']
  #allocation1 [shape = 'u32[144,128]{1,0:T(1,128)}', space=vmem, size = 0x12000, scoped, tag = 'internal scratch']
  #allocation2 [shape = 'f32[36,72]{1,0:T(8,128)}', space=vmem, size = 0x5000, scoped, tag = 'scratch operand']
  %s0 = inlined_call_operand.vmem [shape: f32[36,72], index: 0, kind: input, shape index: {}]
  %s1 = inlined_call_operand.vmem [shape: f32[3,72,64], index: 1, kind: input, shape index: {}]
  %s2 = inlined_call_operand.vmem [shape: f32[1,64], index: 2, kind: input, shape index: {}]
  %s3 = inlined_call_operand.vmem [shape: f32[3,72,64], index: 3, kind: input, shape index: {}]
  %s4 = inlined_call_operand.vmem [shape: f32[1,64], index: 4, kind: input, shape index: {}]
  %s5 = inlined_call_operand.vmem [shape: f32[32,64], index: 5, kind: output, shape index: {}]
  %s6 = sld [smem:[#allocation0]]
  $region30: #{residual_block_db.1} parent=0
    _
  %s8 = ssub.s32 1, %s6
  %s9 = scalar_select 0, %s8, %s6
  // Predicated region
  $region2: #{residual_block_db.1} parent=0 // pred_check
    _
  $region3: #{residual_block_db.1} parent=0 // pred_check_branch
    %11 = sbr.rel (0) target = $region5
  $region4: #{residual_block_db.1} parent=0 // pred_region
    _
  $region5: #{residual_block_db.1} parent=0 // pred_fallthru
    _
  // Predicated region
  $region6: #{residual_block_db.1} parent=0 // pred_check
    _
  $region7: #{residual_block_db.1} parent=0 // pred_check_branch
    %13 = sbr.rel (0) target = $region9
  $region8: #{residual_block_db.1} parent=0 // pred_region
    _
  $region9: #{residual_block_db.1} parent=0 // pred_fallthru
    _
  // Predicated region
  $region10: #{residual_block_db.1} parent=0 // pred_check
    _
  $region11: #{residual_block_db.1} parent=0 // pred_check_branch
    %15 = sbr.rel (0) target = $region13
  $region12: #{residual_block_db.1} parent=0 // pred_region
    _
  $region13: #{residual_block_db.1} parent=0 // pred_fallthru
    _
  // Predicated region
  $region14: #{residual_block_db.1} parent=0 // pred_check
    _
  $region15: #{residual_block_db.1} parent=0 // pred_check_branch
    %17 = sbr.rel (0) target = $region17
  $region16: #{residual_block_db.1} parent=0 // pred_region
    _
  $region17: #{residual_block_db.1} parent=0 // pred_fallthru
    _
  // Predicated region
  $region18: #{residual_block_db.1} parent=0 // pred_check
    _
  $region19: #{residual_block_db.1} parent=0 // pred_check_branch
    %19 = sbr.rel (0) target = $region21
  $region20: #{residual_block_db.1} parent=0 // pred_region
    _
  $region21: #{residual_block_db.1} parent=0 // pred_fallthru
    _
  %v20 = vld [vmem:[%s0] sm:$0xff]
  %v21 = vld [vmem:[%s0 + $0x8] sm:$0xff]
  %v22 = vld [vmem:[%s0 + $0x10] sm:$0xff]
  %v23 = vld [vmem:[%s0 + $0x18] sm:$0xff]
  %v24 = vld [vmem:[%s0 + $0x20] sm:$0xf]
  %vm25 = vcmask 588800
  %26 = vst.msk [vmem:[#allocation2] sm:$0xff] %vm25, 0.0
  %27 = vst.msk [vmem:[#allocation2 + $0x8] sm:$0xff] %vm25, 0.0
  %28 = vst.msk [vmem:[#allocation2 + $0x10] sm:$0xff] %vm25, 0.0
  %29 = vst.msk [vmem:[#allocation2 + $0x18] sm:$0xff] %vm25, 0.0
  %vm30 = vcmask 584704
  %31 = vst.msk [vmem:[#allocation2 + $0x20] sm:$0xf] %vm30, 0.0
  %v32 = vld [vmem:[%s2] sm:$0x1]
  %v34 = vlaneseq
  %v35 = vshrl.u32 %v34, 7
  %v36 = vsub.s32 0, %v35
  %v37 = vrot.slane %v32, %v36
  %v39 = vld [vmem:[%s1] sm:$0xff]
  %v40 = vld [vmem:[%s1 + $0x8] sm:$0xff]
  %v41 = vld [vmem:[%s1 + $0x10] sm:$0xff]
  %v42 = vld [vmem:[%s1 + $0x18] sm:$0xff]
  %v43 = vld [vmem:[%s1 + $0x20] sm:$0xff]
  %v44 = vld [vmem:[%s1 + $0x28] sm:$0xff]
  %v45 = vld [vmem:[%s1 + $0x30] sm:$0xff]
  %v46 = vld [vmem:[%s1 + $0x38] sm:$0xff]
  %v47 = vld [vmem:[%s1 + $0x40] sm:$0xff]
  %v49 = vsel %vm25, %v20, 0
  %v52 = vsel %vm25, %v21, 0
  %54 = vmatprep.subr.mxu0 0.0
  %55 = vmatpush1.msra.mxu0 0.0
  %56 = vmatprep.subr.mxu0 0.0
  %57 = vmatpush1.msra.mxu0 0.0
  %58 = vmatprep.subr.mxu0 0.0
  %59 = vmatpush1.msra.mxu0 0.0
  %60 = vmatprep.subr.mxu0 0.0
  %61 = vmatpush1.msra.mxu0 0.0
  %62 = vmatprep.subr.mxu0 0.0
  %63 = vmatpush1.msra.mxu0 0.0
  %64 = vmatprep.subr.mxu0 0.0
  %65 = vmatpush1.msra.mxu0 0.0
  %66 = vmatprep.subr.mxu0 0.0
  %67 = vmatpush1.msra.mxu0 0.0
  %68 = vmatprep.subr.mxu0 0.0
  %69 = vmatpush1.msra.mxu0 %v47
  %70 = vmatprep.subr.mxu0 0.0
  %71 = vmatpush1.msra.mxu0 %v46
  %72 = vmatprep.subr.mxu0 0.0
  %73 = vmatpush1.msra.mxu0 %v45
  %74 = vmatprep.subr.mxu0 0.0
  %75 = vmatpush1.msra.mxu0 %v44
  %76 = vmatprep.subr.mxu0 0.0
  %77 = vmatpush1.msra.mxu0 %v43
  %78 = vmatprep.subr.mxu0 0.0
  %79 = vmatpush1.msra.mxu0 %v42
  %80 = vmatprep.subr.mxu0 0.0
  %81 = vmatpush1.msra.mxu0 %v41
  %82 = vmatprep.subr.mxu0 0.0
  %83 = vmatpush1.msra.mxu0 %v40
  %84 = vmatprep.subr.mxu0 0.0
  %85 = vmatpush1.msra.mxu0 %v39
  %86 = vmatprep.subr.mxu0 0.0
  %87 = vmatpush2.msra.mxu0 0.0
  %88 = vmatprep.subr.mxu0 0.0
  %89 = vmatpush2.msra.mxu0 0.0
  %90 = vmatprep.subr.mxu0 0.0
  %91 = vmatpush2.msra.mxu0 0.0
  %92 = vmatprep.subr.mxu0 0.0
  %93 = vmatpush2.msra.mxu0 0.0
  %94 = vmatprep.subr.mxu0 0.0
  %95 = vmatpush2.msra.mxu0 0.0
  %96 = vmatprep.subr.mxu0 0.0
  %97 = vmatpush2.msra.mxu0 0.0
  %98 = vmatprep.subr.mxu0 0.0
  %99 = vmatpush2.msra.mxu0 0.0
  %100 = vmatprep.subr.mxu0 0.0
  %101 = vmatpush2.msra.mxu0 0.0
  %102 = vmatprep.subr.mxu0 0.0
  %103 = vmatpush2.msra.mxu0 0.0
  %104 = vmatprep.subr.mxu0 0.0
  %105 = vmatpush2.msra.mxu0 0.0
  %106 = vmatprep.subr.mxu0 0.0
  %107 = vmatpush2.msra.mxu0 0.0
  %108 = vmatprep.subr.mxu0 0.0
  %109 = vmatpush2.msra.mxu0 0.0
  %110 = vmatprep.subr.mxu0 0.0
  %111 = vmatpush2.msra.mxu0 0.0
  %112 = vmatprep.subr.mxu0 0.0
  %113 = vmatpush2.msra.mxu0 0.0
  %114 = vmatprep.subr.mxu0 0.0
  %115 = vmatpush2.msra.mxu0 0.0
  %116 = vmatprep.subr.mxu0 0.0
  %117 = vmatpush2.msra.mxu0 0.0
  %118 = vmatprep.mubr.f32.mxu0 0.0
  %119 = vmatmul.mubr.f32.gmra.mxu0 %v49
  %v120 = vpop.f32.mrf.mxu0
  %v121 = vadd.f32 0.0, %v120
  %v122 = vpop.f32.mrf.mxu0
  %123 = vmatprep.mubr.f32.mxu0 0.0
  %124 = vmatmul.mubr.f32.gmra.mxu0 %v52
  %v125 = vpop.f32.mrf.mxu0
  %v126 = vadd.f32 0.0, %v125
  %v127 = vpop.f32.mrf.mxu0
  %128 = vdwg.mxu0
  %v129 = vadd.f32 %v37, %v121
  %v130 = vadd.f32 %v37, %v126
  %vm134 = vcmask 1045504
  %v135 = vrot.slane %v22, 2
  %v136 = vrot.slane %v23, 2
  %v137 = vsel %vm134, %v135, %v136
  %v138 = vrot.slane %v24, 2
  %v139 = vsel %vm134, %v136, %v138
  %v140 = vsel %vm25, %v137, 0
  %v142 = vsel %vm25, %v139, 0
  %144 = vmatprep.subr.mxu0 0.0
  %145 = vmatpush1.msra.mxu0 0.0
  %146 = vmatprep.subr.mxu0 0.0
  %147 = vmatpush1.msra.mxu0 0.0
  %148 = vmatprep.subr.mxu0 0.0
  %149 = vmatpush1.msra.mxu0 0.0
  %150 = vmatprep.subr.mxu0 0.0
  %151 = vmatpush1.msra.mxu0 0.0
  %152 = vmatprep.subr.mxu0 0.0
  %153 = vmatpush1.msra.mxu0 0.0
  %154 = vmatprep.subr.mxu0 0.0
  %155 = vmatpush1.msra.mxu0 0.0
  %156 = vmatprep.subr.mxu0 0.0
  %157 = vmatpush1.msra.mxu0 0.0
  %158 = vmatprep.subr.mxu0 0.0
  %159 = vmatpush1.msra.mxu0 %v47
  %160 = vmatprep.subr.mxu0 0.0
  %161 = vmatpush1.msra.mxu0 %v46
  %162 = vmatprep.subr.mxu0 0.0
  %163 = vmatpush1.msra.mxu0 %v45
  %164 = vmatprep.subr.mxu0 0.0
  %165 = vmatpush1.msra.mxu0 %v44
  %166 = vmatprep.subr.mxu0 0.0
  %167 = vmatpush1.msra.mxu0 %v43
  %168 = vmatprep.subr.mxu0 0.0
  %169 = vmatpush1.msra.mxu0 %v42
  %170 = vmatprep.subr.mxu0 0.0
  %171 = vmatpush1.msra.mxu0 %v41
  %172 = vmatprep.subr.mxu0 0.0
  %173 = vmatpush1.msra.mxu0 %v40
  %174 = vmatprep.subr.mxu0 0.0
  %175 = vmatpush1.msra.mxu0 %v39
  %176 = vmatprep.subr.mxu0 0.0
  %177 = vmatpush2.msra.mxu0 0.0
  %178 = vmatprep.subr.mxu0 0.0
  %179 = vmatpush2.msra.mxu0 0.0
  %180 = vmatprep.subr.mxu0 0.0
  %181 = vmatpush2.msra.mxu0 0.0
  %182 = vmatprep.subr.mxu0 0.0
  %183 = vmatpush2.msra.mxu0 0.0
  %184 = vmatprep.subr.mxu0 0.0
  %185 = vmatpush2.msra.mxu0 0.0
  %186 = vmatprep.subr.mxu0 0.0
  %187 = vmatpush2.msra.mxu0 0.0
  %188 = vmatprep.subr.mxu0 0.0
  %189 = vmatpush2.msra.mxu0 0.0
  %190 = vmatprep.subr.mxu0 0.0
  %191 = vmatpush2.msra.mxu0 0.0
  %192 = vmatprep.subr.mxu0 0.0
  %193 = vmatpush2.msra.mxu0 0.0
  %194 = vmatprep.subr.mxu0 0.0
  %195 = vmatpush2.msra.mxu0 0.0
  %196 = vmatprep.subr.mxu0 0.0
  %197 = vmatpush2.msra.mxu0 0.0
  %198 = vmatprep.subr.mxu0 0.0
  %199 = vmatpush2.msra.mxu0 0.0
  %200 = vmatprep.subr.mxu0 0.0
  %201 = vmatpush2.msra.mxu0 0.0
  %202 = vmatprep.subr.mxu0 0.0
  %203 = vmatpush2.msra.mxu0 0.0
  %204 = vmatprep.subr.mxu0 0.0
  %205 = vmatpush2.msra.mxu0 0.0
  %206 = vmatprep.subr.mxu0 0.0
  %207 = vmatpush2.msra.mxu0 0.0
  %208 = vmatprep.mubr.f32.mxu0 0.0
  %209 = vmatmul.mubr.f32.gmra.mxu0 %v140
  %v210 = vpop.f32.mrf.mxu0
  %v211 = vadd.f32 0.0, %v210
  %v212 = vpop.f32.mrf.mxu0
  %213 = vmatprep.mubr.f32.mxu0 0.0
  %214 = vmatmul.mubr.f32.gmra.mxu0 %v142
  %v215 = vpop.f32.mrf.mxu0
  %v216 = vadd.f32 0.0, %v215
  %v217 = vpop.f32.mrf.mxu0
  %218 = vdwg.mxu0
  %v219 = vadd.f32 %v37, %v211
  %v220 = vadd.f32 %v37, %v216
  %s221 = scalar_lea.vmem %s1, 72
  %v222 = vld [vmem:[%s221] sm:$0xff]
  %v223 = vld [vmem:[%s221 + $0x8] sm:$0xff]
  %v224 = vld [vmem:[%s221 + $0x10] sm:$0xff]
  %v225 = vld [vmem:[%s221 + $0x18] sm:$0xff]
  %v226 = vld [vmem:[%s221 + $0x20] sm:$0xff]
  %v227 = vld [vmem:[%s221 + $0x28] sm:$0xff]
  %v228 = vld [vmem:[%s221 + $0x30] sm:$0xff]
  %v229 = vld [vmem:[%s221 + $0x38] sm:$0xff]
  %v230 = vld [vmem:[%s221 + $0x40] sm:$0xff]
  %vm231 = vcmask 1046528
  %v232 = vrot.slane %v20, 1
  %v233 = vrot.slane %v21, 1
  %v234 = vsel %vm231, %v232, %v233
  %v235 = vrot.slane %v22, 1
  %v236 = vsel %vm231, %v233, %v235
  %v237 = vsel %vm25, %v234, 0
  %v239 = vsel %vm25, %v236, 0
  %241 = vmatprep.subr.mxu0 0.0
  %242 = vmatpush1.msra.mxu0 0.0
  %243 = vmatprep.subr.mxu0 0.0
  %244 = vmatpush1.msra.mxu0 0.0
  %245 = vmatprep.subr.mxu0 0.0
  %246 = vmatpush1.msra.mxu0 0.0
  %247 = vmatprep.subr.mxu0 0.0
  %248 = vmatpush1.msra.mxu0 0.0
  %249 = vmatprep.subr.mxu0 0.0
  %250 = vmatpush1.msra.mxu0 0.0
  %251 = vmatprep.subr.mxu0 0.0
  %252 = vmatpush1.msra.mxu0 0.0
  %253 = vmatprep.subr.mxu0 0.0
  %254 = vmatpush1.msra.mxu0 0.0
  %255 = vmatprep.subr.mxu0 0.0
  %256 = vmatpush1.msra.mxu0 %v230
  %257 = vmatprep.subr.mxu0 0.0
  %258 = vmatpush1.msra.mxu0 %v229
  %259 = vmatprep.subr.mxu0 0.0
  %260 = vmatpush1.msra.mxu0 %v228
  %261 = vmatprep.subr.mxu0 0.0
  %262 = vmatpush1.msra.mxu0 %v227
  %263 = vmatprep.subr.mxu0 0.0
  %264 = vmatpush1.msra.mxu0 %v226
  %265 = vmatprep.subr.mxu0 0.0
  %266 = vmatpush1.msra.mxu0 %v225
  %267 = vmatprep.subr.mxu0 0.0
  %268 = vmatpush1.msra.mxu0 %v224
  %269 = vmatprep.subr.mxu0 0.0
  %270 = vmatpush1.msra.mxu0 %v223
  %271 = vmatprep.subr.mxu0 0.0
  %272 = vmatpush1.msra.mxu0 %v222
  %273 = vmatprep.subr.mxu0 0.0
  %274 = vmatpush2.msra.mxu0 0.0
  %275 = vmatprep.subr.mxu0 0.0
  %276 = vmatpush2.msra.mxu0 0.0
  %277 = vmatprep.subr.mxu0 0.0
  %278 = vmatpush2.msra.mxu0 0.0
  %279 = vmatprep.subr.mxu0 0.0
  %280 = vmatpush2.msra.mxu0 0.0
  %281 = vmatprep.subr.mxu0 0.0
  %282 = vmatpush2.msra.mxu0 0.0
  %283 = vmatprep.subr.mxu0 0.0
  %284 = vmatpush2.msra.mxu0 0.0
  %285 = vmatprep.subr.mxu0 0.0
  %286 = vmatpush2.msra.mxu0 0.0
  %287 = vmatprep.subr.mxu0 0.0
  %288 = vmatpush2.msra.mxu0 0.0
  %289 = vmatprep.subr.mxu0 0.0
  %290 = vmatpush2.msra.mxu0 0.0
  %291 = vmatprep.subr.mxu0 0.0
  %292 = vmatpush2.msra.mxu0 0.0
  %293 = vmatprep.subr.mxu0 0.0
  %294 = vmatpush2.msra.mxu0 0.0
  %295 = vmatprep.subr.mxu0 0.0
  %296 = vmatpush2.msra.mxu0 0.0
  %297 = vmatprep.subr.mxu0 0.0
  %298 = vmatpush2.msra.mxu0 0.0
  %299 = vmatprep.subr.mxu0 0.0
  %300 = vmatpush2.msra.mxu0 0.0
  %301 = vmatprep.subr.mxu0 0.0
  %302 = vmatpush2.msra.mxu0 0.0
  %303 = vmatprep.subr.mxu0 0.0
  %304 = vmatpush2.msra.mxu0 0.0
  %305 = vmatprep.mubr.f32.mxu0 0.0
  %306 = vmatmul.mubr.f32.gmra.mxu0 %v237
  %v307 = vpop.f32.mrf.mxu0
  %v308 = vadd.f32 0.0, %v307
  %v309 = vpop.f32.mrf.mxu0
  %310 = vmatprep.mubr.f32.mxu0 0.0
  %311 = vmatmul.mubr.f32.gmra.mxu0 %v239
  %v312 = vpop.f32.mrf.mxu0
  %v313 = vadd.f32 0.0, %v312
  %v314 = vpop.f32.mrf.mxu0
  %315 = vdwg.mxu0
  %v316 = vadd.f32 %v129, %v308
  %v317 = vadd.f32 %v130, %v313
  %vm318 = vcmask 1044480
  %v319 = vrot.slane %v22, 3
  %v320 = vrot.slane %v23, 3
  %v321 = vsel %vm318, %v319, %v320
  %v322 = vrot.slane %v24, 3
  %v323 = vsel %vm318, %v320, %v322
  %v324 = vsel %vm25, %v321, 0
  %v326 = vsel %vm25, %v323, 0
  %328 = vmatprep.subr.mxu0 0.0
  %329 = vmatpush1.msra.mxu0 0.0
  %330 = vmatprep.subr.mxu0 0.0
  %331 = vmatpush1.msra.mxu0 0.0
  %332 = vmatprep.subr.mxu0 0.0
  %333 = vmatpush1.msra.mxu0 0.0
  %334 = vmatprep.subr.mxu0 0.0
  %335 = vmatpush1.msra.mxu0 0.0
  %336 = vmatprep.subr.mxu0 0.0
  %337 = vmatpush1.msra.mxu0 0.0
  %338 = vmatprep.subr.mxu0 0.0
  %339 = vmatpush1.msra.mxu0 0.0
  %340 = vmatprep.subr.mxu0 0.0
  %341 = vmatpush1.msra.mxu0 0.0
  %342 = vmatprep.subr.mxu0 0.0
  %343 = vmatpush1.msra.mxu0 %v230
  %344 = vmatprep.subr.mxu0 0.0
  %345 = vmatpush1.msra.mxu0 %v229
  %346 = vmatprep.subr.mxu0 0.0
  %347 = vmatpush1.msra.mxu0 %v228
  %348 = vmatprep.subr.mxu0 0.0
  %349 = vmatpush1.msra.mxu0 %v227
  %350 = vmatprep.subr.mxu0 0.0
  %351 = vmatpush1.msra.mxu0 %v226
  %352 = vmatprep.subr.mxu0 0.0
  %353 = vmatpush1.msra.mxu0 %v225
  %354 = vmatprep.subr.mxu0 0.0
  %355 = vmatpush1.msra.mxu0 %v224
  %356 = vmatprep.subr.mxu0 0.0
  %357 = vmatpush1.msra.mxu0 %v223
  %358 = vmatprep.subr.mxu0 0.0
  %359 = vmatpush1.msra.mxu0 %v222
  %360 = vmatprep.subr.mxu0 0.0
  %361 = vmatpush2.msra.mxu0 0.0
  %362 = vmatprep.subr.mxu0 0.0
  %363 = vmatpush2.msra.mxu0 0.0
  %364 = vmatprep.subr.mxu0 0.0
  %365 = vmatpush2.msra.mxu0 0.0
  %366 = vmatprep.subr.mxu0 0.0
  %367 = vmatpush2.msra.mxu0 0.0
  %368 = vmatprep.subr.mxu0 0.0
  %369 = vmatpush2.msra.mxu0 0.0
  %370 = vmatprep.subr.mxu0 0.0
  %371 = vmatpush2.msra.mxu0 0.0
  %372 = vmatprep.subr.mxu0 0.0
  %373 = vmatpush2.msra.mxu0 0.0
  %374 = vmatprep.subr.mxu0 0.0
  %375 = vmatpush2.msra.mxu0 0.0
  %376 = vmatprep.subr.mxu0 0.0
  %377 = vmatpush2.msra.mxu0 0.0
  %378 = vmatprep.subr.mxu0 0.0
  %379 = vmatpush2.msra.mxu0 0.0
  %380 = vmatprep.subr.mxu0 0.0
  %381 = vmatpush2.msra.mxu0 0.0
  %382 = vmatprep.subr.mxu0 0.0
  %383 = vmatpush2.msra.mxu0 0.0
  %384 = vmatprep.subr.mxu0 0.0
  %385 = vmatpush2.msra.mxu0 0.0
  %386 = vmatprep.subr.mxu0 0.0
  %387 = vmatpush2.msra.mxu0 0.0
  %388 = vmatprep.subr.mxu0 0.0
  %389 = vmatpush2.msra.mxu0 0.0
  %390 = vmatprep.subr.mxu0 0.0
  %391 = vmatpush2.msra.mxu0 0.0
  %392 = vmatprep.mubr.f32.mxu0 0.0
  %393 = vmatmul.mubr.f32.gmra.mxu0 %v324
  %v394 = vpop.f32.mrf.mxu0
  %v395 = vadd.f32 0.0, %v394
  %v396 = vpop.f32.mrf.mxu0
  %397 = vmatprep.mubr.f32.mxu0 0.0
  %398 = vmatmul.mubr.f32.gmra.mxu0 %v326
  %v399 = vpop.f32.mrf.mxu0
  %v400 = vadd.f32 0.0, %v399
  %v401 = vpop.f32.mrf.mxu0
  %402 = vdwg.mxu0
  %v403 = vadd.f32 %v219, %v395
  %v404 = vadd.f32 %v220, %v400
  %s405 = scalar_lea.vmem %s1, 144
  %v406 = vld [vmem:[%s405] sm:$0xff]
  %v407 = vld [vmem:[%s405 + $0x8] sm:$0xff]
  %v408 = vld [vmem:[%s405 + $0x10] sm:$0xff]
  %v409 = vld [vmem:[%s405 + $0x18] sm:$0xff]
  %v410 = vld [vmem:[%s405 + $0x20] sm:$0xff]
  %v411 = vld [vmem:[%s405 + $0x28] sm:$0xff]
  %v412 = vld [vmem:[%s405 + $0x30] sm:$0xff]
  %v413 = vld [vmem:[%s405 + $0x38] sm:$0xff]
  %v414 = vld [vmem:[%s405 + $0x40] sm:$0xff]
  %v415 = vrot.slane %v20, 2
  %v416 = vrot.slane %v21, 2
  %v417 = vsel %vm134, %v415, %v416
  %v418 = vsel %vm134, %v416, %v135
  %v419 = vsel %vm25, %v417, 0
  %v421 = vsel %vm25, %v418, 0
  %423 = vmatprep.subr.mxu0 0.0
  %424 = vmatpush1.msra.mxu0 0.0
  %425 = vmatprep.subr.mxu0 0.0
  %426 = vmatpush1.msra.mxu0 0.0
  %427 = vmatprep.subr.mxu0 0.0
  %428 = vmatpush1.msra.mxu0 0.0
  %429 = vmatprep.subr.mxu0 0.0
  %430 = vmatpush1.msra.mxu0 0.0
  %431 = vmatprep.subr.mxu0 0.0
  %432 = vmatpush1.msra.mxu0 0.0
  %433 = vmatprep.subr.mxu0 0.0
  %434 = vmatpush1.msra.mxu0 0.0
  %435 = vmatprep.subr.mxu0 0.0
  %436 = vmatpush1.msra.mxu0 0.0
  %437 = vmatprep.subr.mxu0 0.0
  %438 = vmatpush1.msra.mxu0 %v414
  %439 = vmatprep.subr.mxu0 0.0
  %440 = vmatpush1.msra.mxu0 %v413
  %441 = vmatprep.subr.mxu0 0.0
  %442 = vmatpush1.msra.mxu0 %v412
  %443 = vmatprep.subr.mxu0 0.0
  %444 = vmatpush1.msra.mxu0 %v411
  %445 = vmatprep.subr.mxu0 0.0
  %446 = vmatpush1.msra.mxu0 %v410
  %447 = vmatprep.subr.mxu0 0.0
  %448 = vmatpush1.msra.mxu0 %v409
  %449 = vmatprep.subr.mxu0 0.0
  %450 = vmatpush1.msra.mxu0 %v408
  %451 = vmatprep.subr.mxu0 0.0
  %452 = vmatpush1.msra.mxu0 %v407
  %453 = vmatprep.subr.mxu0 0.0
  %454 = vmatpush1.msra.mxu0 %v406
  %455 = vmatprep.subr.mxu0 0.0
  %456 = vmatpush2.msra.mxu0 0.0
  %457 = vmatprep.subr.mxu0 0.0
  %458 = vmatpush2.msra.mxu0 0.0
  %459 = vmatprep.subr.mxu0 0.0
  %460 = vmatpush2.msra.mxu0 0.0
  %461 = vmatprep.subr.mxu0 0.0
  %462 = vmatpush2.msra.mxu0 0.0
  %463 = vmatprep.subr.mxu0 0.0
  %464 = vmatpush2.msra.mxu0 0.0
  %465 = vmatprep.subr.mxu0 0.0
  %466 = vmatpush2.msra.mxu0 0.0
  %467 = vmatprep.subr.mxu0 0.0
  %468 = vmatpush2.msra.mxu0 0.0
  %469 = vmatprep.subr.mxu0 0.0
  %470 = vmatpush2.msra.mxu0 0.0
  %471 = vmatprep.subr.mxu0 0.0
  %472 = vmatpush2.msra.mxu0 0.0
  %473 = vmatprep.subr.mxu0 0.0
  %474 = vmatpush2.msra.mxu0 0.0
  %475 = vmatprep.subr.mxu0 0.0
  %476 = vmatpush2.msra.mxu0 0.0
  %477 = vmatprep.subr.mxu0 0.0
  %478 = vmatpush2.msra.mxu0 0.0
  %479 = vmatprep.subr.mxu0 0.0
  %480 = vmatpush2.msra.mxu0 0.0
  %481 = vmatprep.subr.mxu0 0.0
  %482 = vmatpush2.msra.mxu0 0.0
  %483 = vmatprep.subr.mxu0 0.0
  %484 = vmatpush2.msra.mxu0 0.0
  %485 = vmatprep.subr.mxu0 0.0
  %486 = vmatpush2.msra.mxu0 0.0
  %487 = vmatprep.mubr.f32.mxu0 0.0
  %488 = vmatmul.mubr.f32.gmra.mxu0 %v419
  %v489 = vpop.f32.mrf.mxu0
  %v490 = vadd.f32 0.0, %v489
  %v491 = vpop.f32.mrf.mxu0
  %492 = vmatprep.mubr.f32.mxu0 0.0
  %493 = vmatmul.mubr.f32.gmra.mxu0 %v421
  %v494 = vpop.f32.mrf.mxu0
  %v495 = vadd.f32 0.0, %v494
  %v496 = vpop.f32.mrf.mxu0
  %497 = vdwg.mxu0
  %v498 = vadd.f32 %v316, %v490
  %v499 = vadd.f32 %v317, %v495
  %vm500 = vcmask 1043456
  %v501 = vrot.slane %v22, 4
  %v502 = vrot.slane %v23, 4
  %v503 = vsel %vm500, %v501, %v502
  %v504 = vrot.slane %v24, 4
  %v505 = vsel %vm500, %v502, %v504
  %v506 = vsel %vm25, %v503, 0
  %v508 = vsel %vm25, %v505, 0
  %510 = vmatprep.subr.mxu0 0.0
  %511 = vmatpush1.msra.mxu0 0.0
  %512 = vmatprep.subr.mxu0 0.0
  %513 = vmatpush1.msra.mxu0 0.0
  %514 = vmatprep.subr.mxu0 0.0
  %515 = vmatpush1.msra.mxu0 0.0
  %516 = vmatprep.subr.mxu0 0.0
  %517 = vmatpush1.msra.mxu0 0.0
  %518 = vmatprep.subr.mxu0 0.0
  %519 = vmatpush1.msra.mxu0 0.0
  %520 = vmatprep.subr.mxu0 0.0
  %521 = vmatpush1.msra.mxu0 0.0
  %522 = vmatprep.subr.mxu0 0.0
  %523 = vmatpush1.msra.mxu0 0.0
  %524 = vmatprep.subr.mxu0 0.0
  %525 = vmatpush1.msra.mxu0 %v414
  %526 = vmatprep.subr.mxu0 0.0
  %527 = vmatpush1.msra.mxu0 %v413
  %528 = vmatprep.subr.mxu0 0.0
  %529 = vmatpush1.msra.mxu0 %v412
  %530 = vmatprep.subr.mxu0 0.0
  %531 = vmatpush1.msra.mxu0 %v411
  %532 = vmatprep.subr.mxu0 0.0
  %533 = vmatpush1.msra.mxu0 %v410
  %534 = vmatprep.subr.mxu0 0.0
  %535 = vmatpush1.msra.mxu0 %v409
  %536 = vmatprep.subr.mxu0 0.0
  %537 = vmatpush1.msra.mxu0 %v408
  %538 = vmatprep.subr.mxu0 0.0
  %539 = vmatpush1.msra.mxu0 %v407
  %540 = vmatprep.subr.mxu0 0.0
  %541 = vmatpush1.msra.mxu0 %v406
  %542 = vmatprep.subr.mxu0 0.0
  %543 = vmatpush2.msra.mxu0 0.0
  %544 = vmatprep.subr.mxu0 0.0
  %545 = vmatpush2.msra.mxu0 0.0
  %546 = vmatprep.subr.mxu0 0.0
  %547 = vmatpush2.msra.mxu0 0.0
  %548 = vmatprep.subr.mxu0 0.0
  %549 = vmatpush2.msra.mxu0 0.0
  %550 = vmatprep.subr.mxu0 0.0
  %551 = vmatpush2.msra.mxu0 0.0
  %552 = vmatprep.subr.mxu0 0.0
  %553 = vmatpush2.msra.mxu0 0.0
  %554 = vmatprep.subr.mxu0 0.0
  %555 = vmatpush2.msra.mxu0 0.0
  %556 = vmatprep.subr.mxu0 0.0
  %557 = vmatpush2.msra.mxu0 0.0
  %558 = vmatprep.subr.mxu0 0.0
  %559 = vmatpush2.msra.mxu0 0.0
  %560 = vmatprep.subr.mxu0 0.0
  %561 = vmatpush2.msra.mxu0 0.0
  %562 = vmatprep.subr.mxu0 0.0
  %563 = vmatpush2.msra.mxu0 0.0
  %564 = vmatprep.subr.mxu0 0.0
  %565 = vmatpush2.msra.mxu0 0.0
  %566 = vmatprep.subr.mxu0 0.0
  %567 = vmatpush2.msra.mxu0 0.0
  %568 = vmatprep.subr.mxu0 0.0
  %569 = vmatpush2.msra.mxu0 0.0
  %570 = vmatprep.subr.mxu0 0.0
  %571 = vmatpush2.msra.mxu0 0.0
  %572 = vmatprep.subr.mxu0 0.0
  %573 = vmatpush2.msra.mxu0 0.0
  %574 = vmatprep.mubr.f32.mxu0 0.0
  %575 = vmatmul.mubr.f32.gmra.mxu0 %v506
  %v576 = vpop.f32.mrf.mxu0
  %v577 = vadd.f32 0.0, %v576
  %v578 = vpop.f32.mrf.mxu0
  %579 = vmatprep.mubr.f32.mxu0 0.0
  %580 = vmatmul.mubr.f32.gmra.mxu0 %v508
  %v581 = vpop.f32.mrf.mxu0
  %v582 = vadd.f32 0.0, %v581
  %v583 = vpop.f32.mrf.mxu0
  %584 = vdwg.mxu0
  %v585 = vadd.f32 %v403, %v577
  %v586 = vadd.f32 %v404, %v582
  %v587 = vmax.f32 %v498, 0.0
  %v588 = vmax.f32 %v499, 0.0
  %591 = vrot.lane.b32.xlu0 %v587, 4
  %v592 = vpop.permute.xlu0 %591
  %593 = vrot.lane.b32.xlu0 %v588, 4
  %v594 = vpop.permute.xlu0 %593
  %vm597 = vcmask 556064
  %598 = vst.msk [vmem:[#allocation2 + $0x1] sm:$0xff] %vm597, %v592
  %599 = vst.msk [vmem:[#allocation2 + $0x9] sm:$0xff] %vm597, %v594
  %v600 = vmax.f32 %v585, 0.0
  %v601 = vmax.f32 %v586, 0.0
  %604 = vrot.lane.b32.xlu0 %v600, 4
  %v605 = vpop.permute.xlu0 %604
  %606 = vrot.lane.b32.xlu0 %v601, 4
  %v607 = vpop.permute.xlu0 %606
  %610 = vst.msk [vmem:[#allocation2 + $0x13] sm:$0xff] %vm597, %v605
  %611 = vst.msk [vmem:[#allocation2 + $0x1b] sm:$0xff] %vm597, %v607
  %v612 = vld [vmem:[#allocation2] sm:$0xff]
  %v613 = vld [vmem:[#allocation2 + $0x8] sm:$0xff]
  %v614 = vld [vmem:[#allocation2 + $0x10] sm:$0xff]
  %v615 = vld [vmem:[#allocation2 + $0x18] sm:$0xff]
  %v616 = vld [vmem:[#allocation2 + $0x20] sm:$0xf]
  %v617 = vld [vmem:[%s4] sm:$0x1]
  %v619 = vlaneseq
  %v620 = vshrl.u32 %v619, 7
  %v621 = vsub.s32 0, %v620
  %v622 = vrot.slane %v617, %v621
  %v624 = vld [vmem:[%s3] sm:$0xff]
  %v625 = vld [vmem:[%s3 + $0x8] sm:$0xff]
  %v626 = vld [vmem:[%s3 + $0x10] sm:$0xff]
  %v627 = vld [vmem:[%s3 + $0x18] sm:$0xff]
  %v628 = vld [vmem:[%s3 + $0x20] sm:$0xff]
  %v629 = vld [vmem:[%s3 + $0x28] sm:$0xff]
  %v630 = vld [vmem:[%s3 + $0x30] sm:$0xff]
  %v631 = vld [vmem:[%s3 + $0x38] sm:$0xff]
  %v632 = vld [vmem:[%s3 + $0x40] sm:$0xff]
  %v634 = vsel %vm25, %v612, 0
  %v637 = vsel %vm25, %v613, 0
  %639 = vmatprep.subr.mxu0 0.0
  %640 = vmatpush1.msra.mxu0 0.0
  %641 = vmatprep.subr.mxu0 0.0
  %642 = vmatpush1.msra.mxu0 0.0
  %643 = vmatprep.subr.mxu0 0.0
  %644 = vmatpush1.msra.mxu0 0.0
  %645 = vmatprep.subr.mxu0 0.0
  %646 = vmatpush1.msra.mxu0 0.0
  %647 = vmatprep.subr.mxu0 0.0
  %648 = vmatpush1.msra.mxu0 0.0
  %649 = vmatprep.subr.mxu0 0.0
  %650 = vmatpush1.msra.mxu0 0.0
  %651 = vmatprep.subr.mxu0 0.0
  %652 = vmatpush1.msra.mxu0 0.0
  %653 = vmatprep.subr.mxu0 0.0
  %654 = vmatpush1.msra.mxu0 %v632
  %655 = vmatprep.subr.mxu0 0.0
  %656 = vmatpush1.msra.mxu0 %v631
  %657 = vmatprep.subr.mxu0 0.0
  %658 = vmatpush1.msra.mxu0 %v630
  %659 = vmatprep.subr.mxu0 0.0
  %660 = vmatpush1.msra.mxu0 %v629
  %661 = vmatprep.subr.mxu0 0.0
  %662 = vmatpush1.msra.mxu0 %v628
  %663 = vmatprep.subr.mxu0 0.0
  %664 = vmatpush1.msra.mxu0 %v627
  %665 = vmatprep.subr.mxu0 0.0
  %666 = vmatpush1.msra.mxu0 %v626
  %667 = vmatprep.subr.mxu0 0.0
  %668 = vmatpush1.msra.mxu0 %v625
  %669 = vmatprep.subr.mxu0 0.0
  %670 = vmatpush1.msra.mxu0 %v624
  %671 = vmatprep.subr.mxu0 0.0
  %672 = vmatpush2.msra.mxu0 0.0
  %673 = vmatprep.subr.mxu0 0.0
  %674 = vmatpush2.msra.mxu0 0.0
  %675 = vmatprep.subr.mxu0 0.0
  %676 = vmatpush2.msra.mxu0 0.0
  %677 = vmatprep.subr.mxu0 0.0
  %678 = vmatpush2.msra.mxu0 0.0
  %679 = vmatprep.subr.mxu0 0.0
  %680 = vmatpush2.msra.mxu0 0.0
  %681 = vmatprep.subr.mxu0 0.0
  %682 = vmatpush2.msra.mxu0 0.0
  %683 = vmatprep.subr.mxu0 0.0
  %684 = vmatpush2.msra.mxu0 0.0
  %685 = vmatprep.subr.mxu0 0.0
  %686 = vmatpush2.msra.mxu0 0.0
  %687 = vmatprep.subr.mxu0 0.0
  %688 = vmatpush2.msra.mxu0 0.0
  %689 = vmatprep.subr.mxu0 0.0
  %690 = vmatpush2.msra.mxu0 0.0
  %691 = vmatprep.subr.mxu0 0.0
  %692 = vmatpush2.msra.mxu0 0.0
  %693 = vmatprep.subr.mxu0 0.0
  %694 = vmatpush2.msra.mxu0 0.0
  %695 = vmatprep.subr.mxu0 0.0
  %696 = vmatpush2.msra.mxu0 0.0
  %697 = vmatprep.subr.mxu0 0.0
  %698 = vmatpush2.msra.mxu0 0.0
  %699 = vmatprep.subr.mxu0 0.0
  %700 = vmatpush2.msra.mxu0 0.0
  %701 = vmatprep.subr.mxu0 0.0
  %702 = vmatpush2.msra.mxu0 0.0
  %703 = vmatprep.mubr.f32.mxu0 0.0
  %704 = vmatmul.mubr.f32.gmra.mxu0 %v634
  %v705 = vpop.f32.mrf.mxu0
  %v706 = vadd.f32 0.0, %v705
  %v707 = vpop.f32.mrf.mxu0
  %708 = vmatprep.mubr.f32.mxu0 0.0
  %709 = vmatmul.mubr.f32.gmra.mxu0 %v637
  %v710 = vpop.f32.mrf.mxu0
  %v711 = vadd.f32 0.0, %v710
  %v712 = vpop.f32.mrf.mxu0
  %713 = vdwg.mxu0
  %v714 = vadd.f32 %v622, %v706
  %v715 = vadd.f32 %v622, %v711
  %v719 = vrot.slane %v614, 2
  %v720 = vrot.slane %v615, 2
  %v721 = vsel %vm134, %v719, %v720
  %v722 = vrot.slane %v616, 2
  %v723 = vsel %vm134, %v720, %v722
  %v724 = vsel %vm25, %v721, 0
  %v726 = vsel %vm25, %v723, 0
  %728 = vmatprep.subr.mxu0 0.0
  %729 = vmatpush1.msra.mxu0 0.0
  %730 = vmatprep.subr.mxu0 0.0
  %731 = vmatpush1.msra.mxu0 0.0
  %732 = vmatprep.subr.mxu0 0.0
  %733 = vmatpush1.msra.mxu0 0.0
  %734 = vmatprep.subr.mxu0 0.0
  %735 = vmatpush1.msra.mxu0 0.0
  %736 = vmatprep.subr.mxu0 0.0
  %737 = vmatpush1.msra.mxu0 0.0
  %738 = vmatprep.subr.mxu0 0.0
  %739 = vmatpush1.msra.mxu0 0.0
  %740 = vmatprep.subr.mxu0 0.0
  %741 = vmatpush1.msra.mxu0 0.0
  %742 = vmatprep.subr.mxu0 0.0
  %743 = vmatpush1.msra.mxu0 %v632
  %744 = vmatprep.subr.mxu0 0.0
  %745 = vmatpush1.msra.mxu0 %v631
  %746 = vmatprep.subr.mxu0 0.0
  %747 = vmatpush1.msra.mxu0 %v630
  %748 = vmatprep.subr.mxu0 0.0
  %749 = vmatpush1.msra.mxu0 %v629
  %750 = vmatprep.subr.mxu0 0.0
  %751 = vmatpush1.msra.mxu0 %v628
  %752 = vmatprep.subr.mxu0 0.0
  %753 = vmatpush1.msra.mxu0 %v627
  %754 = vmatprep.subr.mxu0 0.0
  %755 = vmatpush1.msra.mxu0 %v626
  %756 = vmatprep.subr.mxu0 0.0
  %757 = vmatpush1.msra.mxu0 %v625
  %758 = vmatprep.subr.mxu0 0.0
  %759 = vmatpush1.msra.mxu0 %v624
  %760 = vmatprep.subr.mxu0 0.0
  %761 = vmatpush2.msra.mxu0 0.0
  %762 = vmatprep.subr.mxu0 0.0
  %763 = vmatpush2.msra.mxu0 0.0
  %764 = vmatprep.subr.mxu0 0.0
  %765 = vmatpush2.msra.mxu0 0.0
  %766 = vmatprep.subr.mxu0 0.0
  %767 = vmatpush2.msra.mxu0 0.0
  %768 = vmatprep.subr.mxu0 0.0
  %769 = vmatpush2.msra.mxu0 0.0
  %770 = vmatprep.subr.mxu0 0.0
  %771 = vmatpush2.msra.mxu0 0.0
  %772 = vmatprep.subr.mxu0 0.0
  %773 = vmatpush2.msra.mxu0 0.0
  %774 = vmatprep.subr.mxu0 0.0
  %775 = vmatpush2.msra.mxu0 0.0
  %776 = vmatprep.subr.mxu0 0.0
  %777 = vmatpush2.msra.mxu0 0.0
  %778 = vmatprep.subr.mxu0 0.0
  %779 = vmatpush2.msra.mxu0 0.0
  %780 = vmatprep.subr.mxu0 0.0
  %781 = vmatpush2.msra.mxu0 0.0
  %782 = vmatprep.subr.mxu0 0.0
  %783 = vmatpush2.msra.mxu0 0.0
  %784 = vmatprep.subr.mxu0 0.0
  %785 = vmatpush2.msra.mxu0 0.0
  %786 = vmatprep.subr.mxu0 0.0
  %787 = vmatpush2.msra.mxu0 0.0
  %788 = vmatprep.subr.mxu0 0.0
  %789 = vmatpush2.msra.mxu0 0.0
  %790 = vmatprep.subr.mxu0 0.0
  %791 = vmatpush2.msra.mxu0 0.0
  %792 = vmatprep.mubr.f32.mxu0 0.0
  %793 = vmatmul.mubr.f32.gmra.mxu0 %v724
  %v794 = vpop.f32.mrf.mxu0
  %v795 = vadd.f32 0.0, %v794
  %v796 = vpop.f32.mrf.mxu0
  %797 = vmatprep.mubr.f32.mxu0 0.0
  %798 = vmatmul.mubr.f32.gmra.mxu0 %v726
  %v799 = vpop.f32.mrf.mxu0
  %v800 = vadd.f32 0.0, %v799
  %v801 = vpop.f32.mrf.mxu0
  %802 = vdwg.mxu0
  %v803 = vadd.f32 %v622, %v795
  %v804 = vadd.f32 %v622, %v800
  %s805 = scalar_lea.vmem %s3, 72
  %v806 = vld [vmem:[%s805] sm:$0xff]
  %v807 = vld [vmem:[%s805 + $0x8] sm:$0xff]
  %v808 = vld [vmem:[%s805 + $0x10] sm:$0xff]
  %v809 = vld [vmem:[%s805 + $0x18] sm:$0xff]
  %v810 = vld [vmem:[%s805 + $0x20] sm:$0xff]
  %v811 = vld [vmem:[%s805 + $0x28] sm:$0xff]
  %v812 = vld [vmem:[%s805 + $0x30] sm:$0xff]
  %v813 = vld [vmem:[%s805 + $0x38] sm:$0xff]
  %v814 = vld [vmem:[%s805 + $0x40] sm:$0xff]
  %v815 = vrot.slane %v612, 1
  %v816 = vrot.slane %v613, 1
  %v817 = vsel %vm231, %v815, %v816
  %v818 = vrot.slane %v614, 1
  %v819 = vsel %vm231, %v816, %v818
  %v820 = vsel %vm25, %v817, 0
  %v822 = vsel %vm25, %v819, 0
  %824 = vmatprep.subr.mxu0 0.0
  %825 = vmatpush1.msra.mxu0 0.0
  %826 = vmatprep.subr.mxu0 0.0
  %827 = vmatpush1.msra.mxu0 0.0
  %828 = vmatprep.subr.mxu0 0.0
  %829 = vmatpush1.msra.mxu0 0.0
  %830 = vmatprep.subr.mxu0 0.0
  %831 = vmatpush1.msra.mxu0 0.0
  %832 = vmatprep.subr.mxu0 0.0
  %833 = vmatpush1.msra.mxu0 0.0
  %834 = vmatprep.subr.mxu0 0.0
  %835 = vmatpush1.msra.mxu0 0.0
  %836 = vmatprep.subr.mxu0 0.0
  %837 = vmatpush1.msra.mxu0 0.0
  %838 = vmatprep.subr.mxu0 0.0
  %839 = vmatpush1.msra.mxu0 %v814
  %840 = vmatprep.subr.mxu0 0.0
  %841 = vmatpush1.msra.mxu0 %v813
  %842 = vmatprep.subr.mxu0 0.0
  %843 = vmatpush1.msra.mxu0 %v812
  %844 = vmatprep.subr.mxu0 0.0
  %845 = vmatpush1.msra.mxu0 %v811
  %846 = vmatprep.subr.mxu0 0.0
  %847 = vmatpush1.msra.mxu0 %v810
  %848 = vmatprep.subr.mxu0 0.0
  %849 = vmatpush1.msra.mxu0 %v809
  %850 = vmatprep.subr.mxu0 0.0
  %851 = vmatpush1.msra.mxu0 %v808
  %852 = vmatprep.subr.mxu0 0.0
  %853 = vmatpush1.msra.mxu0 %v807
  %854 = vmatprep.subr.mxu0 0.0
  %855 = vmatpush1.msra.mxu0 %v806
  %856 = vmatprep.subr.mxu0 0.0
  %857 = vmatpush2.msra.mxu0 0.0
  %858 = vmatprep.subr.mxu0 0.0
  %859 = vmatpush2.msra.mxu0 0.0
  %860 = vmatprep.subr.mxu0 0.0
  %861 = vmatpush2.msra.mxu0 0.0
  %862 = vmatprep.subr.mxu0 0.0
  %863 = vmatpush2.msra.mxu0 0.0
  %864 = vmatprep.subr.mxu0 0.0
  %865 = vmatpush2.msra.mxu0 0.0
  %866 = vmatprep.subr.mxu0 0.0
  %867 = vmatpush2.msra.mxu0 0.0
  %868 = vmatprep.subr.mxu0 0.0
  %869 = vmatpush2.msra.mxu0 0.0
  %870 = vmatprep.subr.mxu0 0.0
  %871 = vmatpush2.msra.mxu0 0.0
  %872 = vmatprep.subr.mxu0 0.0
  %873 = vmatpush2.msra.mxu0 0.0
  %874 = vmatprep.subr.mxu0 0.0
  %875 = vmatpush2.msra.mxu0 0.0
  %876 = vmatprep.subr.mxu0 0.0
  %877 = vmatpush2.msra.mxu0 0.0
  %878 = vmatprep.subr.mxu0 0.0
  %879 = vmatpush2.msra.mxu0 0.0
  %880 = vmatprep.subr.mxu0 0.0
  %881 = vmatpush2.msra.mxu0 0.0
  %882 = vmatprep.subr.mxu0 0.0
  %883 = vmatpush2.msra.mxu0 0.0
  %884 = vmatprep.subr.mxu0 0.0
  %885 = vmatpush2.msra.mxu0 0.0
  %886 = vmatprep.subr.mxu0 0.0
  %887 = vmatpush2.msra.mxu0 0.0
  %888 = vmatprep.mubr.f32.mxu0 0.0
  %889 = vmatmul.mubr.f32.gmra.mxu0 %v820
  %v890 = vpop.f32.mrf.mxu0
  %v891 = vadd.f32 0.0, %v890
  %v892 = vpop.f32.mrf.mxu0
  %893 = vmatprep.mubr.f32.mxu0 0.0
  %894 = vmatmul.mubr.f32.gmra.mxu0 %v822
  %v895 = vpop.f32.mrf.mxu0
  %v896 = vadd.f32 0.0, %v895
  %v897 = vpop.f32.mrf.mxu0
  %898 = vdwg.mxu0
  %v899 = vadd.f32 %v714, %v891
  %v900 = vadd.f32 %v715, %v896
  %v901 = vrot.slane %v614, 3
  %v902 = vrot.slane %v615, 3
  %v903 = vsel %vm318, %v901, %v902
  %v904 = vrot.slane %v616, 3
  %v905 = vsel %vm318, %v902, %v904
  %v906 = vsel %vm25, %v903, 0
  %v908 = vsel %vm25, %v905, 0
  %910 = vmatprep.subr.mxu0 0.0
  %911 = vmatpush1.msra.mxu0 0.0
  %912 = vmatprep.subr.mxu0 0.0
  %913 = vmatpush1.msra.mxu0 0.0
  %914 = vmatprep.subr.mxu0 0.0
  %915 = vmatpush1.msra.mxu0 0.0
  %916 = vmatprep.subr.mxu0 0.0
  %917 = vmatpush1.msra.mxu0 0.0
  %918 = vmatprep.subr.mxu0 0.0
  %919 = vmatpush1.msra.mxu0 0.0
  %920 = vmatprep.subr.mxu0 0.0
  %921 = vmatpush1.msra.mxu0 0.0
  %922 = vmatprep.subr.mxu0 0.0
  %923 = vmatpush1.msra.mxu0 0.0
  %924 = vmatprep.subr.mxu0 0.0
  %925 = vmatpush1.msra.mxu0 %v814
  %926 = vmatprep.subr.mxu0 0.0
  %927 = vmatpush1.msra.mxu0 %v813
  %928 = vmatprep.subr.mxu0 0.0
  %929 = vmatpush1.msra.mxu0 %v812
  %930 = vmatprep.subr.mxu0 0.0
  %931 = vmatpush1.msra.mxu0 %v811
  %932 = vmatprep.subr.mxu0 0.0
  %933 = vmatpush1.msra.mxu0 %v810
  %934 = vmatprep.subr.mxu0 0.0
  %935 = vmatpush1.msra.mxu0 %v809
  %936 = vmatprep.subr.mxu0 0.0
  %937 = vmatpush1.msra.mxu0 %v808
  %938 = vmatprep.subr.mxu0 0.0
  %939 = vmatpush1.msra.mxu0 %v807
  %940 = vmatprep.subr.mxu0 0.0
  %941 = vmatpush1.msra.mxu0 %v806
  %942 = vmatprep.subr.mxu0 0.0
  %943 = vmatpush2.msra.mxu0 0.0
  %944 = vmatprep.subr.mxu0 0.0
  %945 = vmatpush2.msra.mxu0 0.0
  %946 = vmatprep.subr.mxu0 0.0
  %947 = vmatpush2.msra.mxu0 0.0
  %948 = vmatprep.subr.mxu0 0.0
  %949 = vmatpush2.msra.mxu0 0.0
  %950 = vmatprep.subr.mxu0 0.0
  %951 = vmatpush2.msra.mxu0 0.0
  %952 = vmatprep.subr.mxu0 0.0
  %953 = vmatpush2.msra.mxu0 0.0
  %954 = vmatprep.subr.mxu0 0.0
  %955 = vmatpush2.msra.mxu0 0.0
  %956 = vmatprep.subr.mxu0 0.0
  %957 = vmatpush2.msra.mxu0 0.0
  %958 = vmatprep.subr.mxu0 0.0
  %959 = vmatpush2.msra.mxu0 0.0
  %960 = vmatprep.subr.mxu0 0.0
  %961 = vmatpush2.msra.mxu0 0.0
  %962 = vmatprep.subr.mxu0 0.0
  %963 = vmatpush2.msra.mxu0 0.0
  %964 = vmatprep.subr.mxu0 0.0
  %965 = vmatpush2.msra.mxu0 0.0
  %966 = vmatprep.subr.mxu0 0.0
  %967 = vmatpush2.msra.mxu0 0.0
  %968 = vmatprep.subr.mxu0 0.0
  %969 = vmatpush2.msra.mxu0 0.0
  %970 = vmatprep.subr.mxu0 0.0
  %971 = vmatpush2.msra.mxu0 0.0
  %972 = vmatprep.subr.mxu0 0.0
  %973 = vmatpush2.msra.mxu0 0.0
  %974 = vmatprep.mubr.f32.mxu0 0.0
  %975 = vmatmul.mubr.f32.gmra.mxu0 %v906
  %v976 = vpop.f32.mrf.mxu0
  %v977 = vadd.f32 0.0, %v976
  %v978 = vpop.f32.mrf.mxu0
  %979 = vmatprep.mubr.f32.mxu0 0.0
  %980 = vmatmul.mubr.f32.gmra.mxu0 %v908
  %v981 = vpop.f32.mrf.mxu0
  %v982 = vadd.f32 0.0, %v981
  %v983 = vpop.f32.mrf.mxu0
  %984 = vdwg.mxu0
  %v985 = vadd.f32 %v803, %v977
  %v986 = vadd.f32 %v804, %v982
  %s987 = scalar_lea.vmem %s3, 144
  %v988 = vld [vmem:[%s987] sm:$0xff]
  %v989 = vld [vmem:[%s987 + $0x8] sm:$0xff]
  %v990 = vld [vmem:[%s987 + $0x10] sm:$0xff]
  %v991 = vld [vmem:[%s987 + $0x18] sm:$0xff]
  %v992 = vld [vmem:[%s987 + $0x20] sm:$0xff]
  %v993 = vld [vmem:[%s987 + $0x28] sm:$0xff]
  %v994 = vld [vmem:[%s987 + $0x30] sm:$0xff]
  %v995 = vld [vmem:[%s987 + $0x38] sm:$0xff]
  %v996 = vld [vmem:[%s987 + $0x40] sm:$0xff]
  %v997 = vrot.slane %v612, 2
  %v998 = vrot.slane %v613, 2
  %v999 = vsel %vm134, %v997, %v998
  %v1000 = vsel %vm134, %v998, %v719
  %v1001 = vsel %vm25, %v999, 0
  %v1003 = vsel %vm25, %v1000, 0
  %1005 = vmatprep.subr.mxu0 0.0
  %1006 = vmatpush1.msra.mxu0 0.0
  %1007 = vmatprep.subr.mxu0 0.0
  %1008 = vmatpush1.msra.mxu0 0.0
  %1009 = vmatprep.subr.mxu0 0.0
  %1010 = vmatpush1.msra.mxu0 0.0
  %1011 = vmatprep.subr.mxu0 0.0
  %1012 = vmatpush1.msra.mxu0 0.0
  %1013 = vmatprep.subr.mxu0 0.0
  %1014 = vmatpush1.msra.mxu0 0.0
  %1015 = vmatprep.subr.mxu0 0.0
  %1016 = vmatpush1.msra.mxu0 0.0
  %1017 = vmatprep.subr.mxu0 0.0
  %1018 = vmatpush1.msra.mxu0 0.0
  %1019 = vmatprep.subr.mxu0 0.0
  %1020 = vmatpush1.msra.mxu0 %v996
  %1021 = vmatprep.subr.mxu0 0.0
  %1022 = vmatpush1.msra.mxu0 %v995
  %1023 = vmatprep.subr.mxu0 0.0
  %1024 = vmatpush1.msra.mxu0 %v994
  %1025 = vmatprep.subr.mxu0 0.0
  %1026 = vmatpush1.msra.mxu0 %v993
  %1027 = vmatprep.subr.mxu0 0.0
  %1028 = vmatpush1.msra.mxu0 %v992
  %1029 = vmatprep.subr.mxu0 0.0
  %1030 = vmatpush1.msra.mxu0 %v991
  %1031 = vmatprep.subr.mxu0 0.0
  %1032 = vmatpush1.msra.mxu0 %v990
  %1033 = vmatprep.subr.mxu0 0.0
  %1034 = vmatpush1.msra.mxu0 %v989
  %1035 = vmatprep.subr.mxu0 0.0
  %1036 = vmatpush1.msra.mxu0 %v988
  %1037 = vmatprep.subr.mxu0 0.0
  %1038 = vmatpush2.msra.mxu0 0.0
  %1039 = vmatprep.subr.mxu0 0.0
  %1040 = vmatpush2.msra.mxu0 0.0
  %1041 = vmatprep.subr.mxu0 0.0
  %1042 = vmatpush2.msra.mxu0 0.0
  %1043 = vmatprep.subr.mxu0 0.0
  %1044 = vmatpush2.msra.mxu0 0.0
  %1045 = vmatprep.subr.mxu0 0.0
  %1046 = vmatpush2.msra.mxu0 0.0
  %1047 = vmatprep.subr.mxu0 0.0
  %1048 = vmatpush2.msra.mxu0 0.0
  %1049 = vmatprep.subr.mxu0 0.0
  %1050 = vmatpush2.msra.mxu0 0.0
  %1051 = vmatprep.subr.mxu0 0.0
  %1052 = vmatpush2.msra.mxu0 0.0
  %1053 = vmatprep.subr.mxu0 0.0
  %1054 = vmatpush2.msra.mxu0 0.0
  %1055 = vmatprep.subr.mxu0 0.0
  %1056 = vmatpush2.msra.mxu0 0.0
  %1057 = vmatprep.subr.mxu0 0.0
  %1058 = vmatpush2.msra.mxu0 0.0
  %1059 = vmatprep.subr.mxu0 0.0
  %1060 = vmatpush2.msra.mxu0 0.0
  %1061 = vmatprep.subr.mxu0 0.0
  %1062 = vmatpush2.msra.mxu0 0.0
  %1063 = vmatprep.subr.mxu0 0.0
  %1064 = vmatpush2.msra.mxu0 0.0
  %1065 = vmatprep.subr.mxu0 0.0
  %1066 = vmatpush2.msra.mxu0 0.0
  %1067 = vmatprep.subr.mxu0 0.0
  %1068 = vmatpush2.msra.mxu0 0.0
  %1069 = vmatprep.mubr.f32.mxu0 0.0
  %1070 = vmatmul.mubr.f32.gmra.mxu0 %v1001
  %v1071 = vpop.f32.mrf.mxu0
  %v1072 = vadd.f32 0.0, %v1071
  %v1073 = vpop.f32.mrf.mxu0
  %1074 = vmatprep.mubr.f32.mxu0 0.0
  %1075 = vmatmul.mubr.f32.gmra.mxu0 %v1003
  %v1076 = vpop.f32.mrf.mxu0
  %v1077 = vadd.f32 0.0, %v1076
  %v1078 = vpop.f32.mrf.mxu0
  %1079 = vdwg.mxu0
  %v1080 = vadd.f32 %v899, %v1072
  %v1081 = vadd.f32 %v900, %v1077
  %v1082 = vrot.slane %v614, 4
  %v1083 = vrot.slane %v615, 4
  %v1084 = vsel %vm500, %v1082, %v1083
  %v1085 = vrot.slane %v616, 4
  %v1086 = vsel %vm500, %v1083, %v1085
  %v1087 = vsel %vm25, %v1084, 0
  %v1089 = vsel %vm25, %v1086, 0
  %1091 = vmatprep.subr.mxu0 0.0
  %1092 = vmatpush1.msra.mxu0 0.0
  %1093 = vmatprep.subr.mxu0 0.0
  %1094 = vmatpush1.msra.mxu0 0.0
  %1095 = vmatprep.subr.mxu0 0.0
  %1096 = vmatpush1.msra.mxu0 0.0
  %1097 = vmatprep.subr.mxu0 0.0
  %1098 = vmatpush1.msra.mxu0 0.0
  %1099 = vmatprep.subr.mxu0 0.0
  %1100 = vmatpush1.msra.mxu0 0.0
  %1101 = vmatprep.subr.mxu0 0.0
  %1102 = vmatpush1.msra.mxu0 0.0
  %1103 = vmatprep.subr.mxu0 0.0
  %1104 = vmatpush1.msra.mxu0 0.0
  %1105 = vmatprep.subr.mxu0 0.0
  %1106 = vmatpush1.msra.mxu0 %v996
  %1107 = vmatprep.subr.mxu0 0.0
  %1108 = vmatpush1.msra.mxu0 %v995
  %1109 = vmatprep.subr.mxu0 0.0
  %1110 = vmatpush1.msra.mxu0 %v994
  %1111 = vmatprep.subr.mxu0 0.0
  %1112 = vmatpush1.msra.mxu0 %v993
  %1113 = vmatprep.subr.mxu0 0.0
  %1114 = vmatpush1.msra.mxu0 %v992
  %1115 = vmatprep.subr.mxu0 0.0
  %1116 = vmatpush1.msra.mxu0 %v991
  %1117 = vmatprep.subr.mxu0 0.0
  %1118 = vmatpush1.msra.mxu0 %v990
  %1119 = vmatprep.subr.mxu0 0.0
  %1120 = vmatpush1.msra.mxu0 %v989
  %1121 = vmatprep.subr.mxu0 0.0
  %1122 = vmatpush1.msra.mxu0 %v988
  %1123 = vmatprep.subr.mxu0 0.0
  %1124 = vmatpush2.msra.mxu0 0.0
  %1125 = vmatprep.subr.mxu0 0.0
  %1126 = vmatpush2.msra.mxu0 0.0
  %1127 = vmatprep.subr.mxu0 0.0
  %1128 = vmatpush2.msra.mxu0 0.0
  %1129 = vmatprep.subr.mxu0 0.0
  %1130 = vmatpush2.msra.mxu0 0.0
  %1131 = vmatprep.subr.mxu0 0.0
  %1132 = vmatpush2.msra.mxu0 0.0
  %1133 = vmatprep.subr.mxu0 0.0
  %1134 = vmatpush2.msra.mxu0 0.0
  %1135 = vmatprep.subr.mxu0 0.0
  %1136 = vmatpush2.msra.mxu0 0.0
  %1137 = vmatprep.subr.mxu0 0.0
  %1138 = vmatpush2.msra.mxu0 0.0
  %1139 = vmatprep.subr.mxu0 0.0
  %1140 = vmatpush2.msra.mxu0 0.0
  %1141 = vmatprep.subr.mxu0 0.0
  %1142 = vmatpush2.msra.mxu0 0.0
  %1143 = vmatprep.subr.mxu0 0.0
  %1144 = vmatpush2.msra.mxu0 0.0
  %1145 = vmatprep.subr.mxu0 0.0
  %1146 = vmatpush2.msra.mxu0 0.0
  %1147 = vmatprep.subr.mxu0 0.0
  %1148 = vmatpush2.msra.mxu0 0.0
  %1149 = vmatprep.subr.mxu0 0.0
  %1150 = vmatpush2.msra.mxu0 0.0
  %1151 = vmatprep.subr.mxu0 0.0
  %1152 = vmatpush2.msra.mxu0 0.0
  %1153 = vmatprep.subr.mxu0 0.0
  %1154 = vmatpush2.msra.mxu0 0.0
  %1155 = vmatprep.mubr.f32.mxu0 0.0
  %1156 = vmatmul.mubr.f32.gmra.mxu0 %v1087
  %v1157 = vpop.f32.mrf.mxu0
  %v1158 = vadd.f32 0.0, %v1157
  %v1159 = vpop.f32.mrf.mxu0
  %1160 = vmatprep.mubr.f32.mxu0 0.0
  %1161 = vmatmul.mubr.f32.gmra.mxu0 %v1089
  %v1162 = vpop.f32.mrf.mxu0
  %v1163 = vadd.f32 0.0, %v1162
  %v1164 = vpop.f32.mrf.mxu0
  %1165 = vdwg.mxu0
  %v1166 = vadd.f32 %v985, %v1158
  %v1167 = vadd.f32 %v986, %v1163
  %1168 = vrot.lane.b32.xlu0 %v234, 124
  %v1169 = vpop.permute.xlu0 %1168
  %1170 = vrot.lane.b32.xlu0 %v236, 124
  %v1171 = vpop.permute.xlu0 %1170
  %v1174 = vadd.f32 %v1080, %v1169
  %v1175 = vadd.f32 %v1081, %v1171
  %vm1176 = vcmask 523264
  %1177 = vst.msk [vmem:[%s5] sm:$0xff] %vm1176, %v1174
  %1178 = vst.msk [vmem:[%s5 + $0x8] sm:$0xff] %vm1176, %v1175
  %1179 = vrot.lane.b32.xlu0 %v321, 124
  %v1180 = vpop.permute.xlu0 %1179
  %1181 = vrot.lane.b32.xlu0 %v323, 124
  %v1182 = vpop.permute.xlu0 %1181
  %v1185 = vadd.f32 %v1166, %v1180
  %v1186 = vadd.f32 %v1167, %v1182
  %1187 = vst.msk [vmem:[%s5 + $0x10] sm:$0xff] %vm1176, %v1185
  %1188 = vst.msk [vmem:[%s5 + $0x18] sm:$0xff] %vm1176, %v1186
  // Predicated region
  $region22: #{residual_block_db.1} parent=0 // pred_check
    _
  $region23: #{residual_block_db.1} parent=0 // pred_check_branch
    %1190 = sbr.rel (0) target = $region25
  $region24: #{residual_block_db.1} parent=0 // pred_region
    _
  $region25: #{residual_block_db.1} parent=0 // pred_fallthru
    _
  // Predicated region
  $region26: #{residual_block_db.1} parent=0 // pred_check
    _
  $region27: #{residual_block_db.1} parent=0 // pred_check_branch
    %1192 = sbr.rel (0) target = $region29
  $region28: #{residual_block_db.1} parent=0 // pred_region
    _
  $region29: #{residual_block_db.1} parent=0 // pred_fallthru
    _

</llo_original>
